<compile_context>
chip_gen: v5e
topology: v5e:2x2
jax: 0.10.0
libtpu: 0.0.40
codegen_flags: <defaults>
</compile_context>

<pallas_src>
import math

import jax
import jax.numpy as jnp
import numpy as np
from jax.experimental import pallas as pl
from jax.experimental.pallas import tpu as pltpu


# ---------------------------------------------------------------------------
# Rotary matrix, exactly as in the PyTorch reference (note the (i-1) quirk).
# ---------------------------------------------------------------------------
def get_rotary_matrix_np(context_window, embedding_dim):
    R = np.zeros((context_window, embedding_dim, embedding_dim), dtype=np.float32)
    for position in range(context_window):
        for i in range(embedding_dim // 2):
            theta = 10000.0 ** (-2.0 * (i - 1) / embedding_dim)
            m_theta = position * theta
            R[position, 2 * i, 2 * i] = np.cos(m_theta)
            R[position, 2 * i, 2 * i + 1] = -np.sin(m_theta)
            R[position, 2 * i + 1, 2 * i] = np.sin(m_theta)
            R[position, 2 * i + 1, 2 * i + 1] = np.cos(m_theta)
    return R


# ---------------------------------------------------------------------------
# Fused kernel: one grid step per head group ("parallel" -> 2 TCs on v7x).
# ---------------------------------------------------------------------------
def _mha_group_kernel(x_ref, wqkv_ref, cos_ref, sin_ref, bias_ref, wo_ref,
                      o_ref, qkv_scr, qrot_scr, krot_scr, v_scr, cat_scr):
    BM, D = x_ref.shape
    M = bias_ref.shape[0]
    B = BM // M
    HGD, D_out = wo_ref.shape
    HG = HGD // D                       # heads in this group
    half = D // 2
    scale = 1.0 / math.sqrt(D)

    # (1) One stacked QKV projection for this head group on the MXU
    #     (bf16 operands, f32 accumulate), staged in VMEM scratch.
    x_bf = x_ref[...].astype(jnp.bfloat16)
    qkv_scr[...] = jnp.dot(x_bf, wqkv_ref[...],
                           preferred_element_type=jnp.float32)   # (BM, 3*HG*D)

    cos = cos_ref[...]                  # (BM, D), rotate-half layout, f32
    sin = sin_ref[...]                  # (BM, D), sign-folded, f32

    # (2) RoPE per head (f32 elementwise + one XLU lane roll), staged as
    #     batched bf16 tensors for a single batched score / PV matmul.
    for h in range(HG):
        q = qkv_scr[:, h * D:(h + 1) * D]                        # (BM, D) f32
        k = qkv_scr[:, (HG + h) * D:(HG + h + 1) * D]
        v = qkv_scr[:, (2 * HG + h) * D:(2 * HG + h + 1) * D]
        q_rot = q * cos + pltpu.roll(q, shift=half, axis=1) * sin
        k_rot = k * cos + pltpu.roll(k, shift=half, axis=1) * sin
        qrot_scr[h * B:(h + 1) * B] = q_rot.reshape(B, M, D).astype(jnp.bfloat16)
        krot_scr[h * B:(h + 1) * B] = k_rot.reshape(B, M, D).astype(jnp.bfloat16)
        v_scr[h * B:(h + 1) * B] = v.reshape(B, M, D).astype(jnp.bfloat16)

    # (3) Batched scores + ONE softmax chain for all (head, batch) pairs.
    s = jnp.einsum('gqd,gkd->gqk', qrot_scr[...], krot_scr[...],
                   preferred_element_type=jnp.float32)           # (HG*B, M, M)
    s = s * scale + bias_ref[...]        # additive causal bias (-1e30 masked)
    s_max = jnp.max(s, axis=-1, keepdims=True)
    e = jnp.exp(s - s_max)
    denom = jnp.sum(e, axis=-1, keepdims=True)
    p = e * pl.reciprocal(denom, approx=True)
    # TODO(synk): SDPA dropout_p=0.1 omitted (deterministic / eval-mode).

    # (4) Batched PV matmul; scatter each head's (BM, D) block into the
    #     lane-aligned cat scratch (no jnp.concatenate / relayout).
    pv = jnp.einsum('gqk,gkd->gqd', p.astype(jnp.bfloat16), v_scr[...],
                    preferred_element_type=jnp.float32)          # (HG*B, M, D)
    for h in range(HG):
        cat_scr[:, h * D:(h + 1) * D] = (
            pv[h * B:(h + 1) * B].reshape(BM, D).astype(jnp.bfloat16))

    # (5) Partial output projection with this group's rows of W_o; the two
    #     group partials (+ bias) are summed in the wrapper.
    out = jnp.dot(cat_scr[...], wo_ref[...], preferred_element_type=jnp.float32)
    o_ref[...] = out.reshape(1, BM, D_out)
    # TODO(synk): trailing nn.Dropout(0.1) omitted (eval-mode semantics).


def rope_mha(x, wqkv, cos_bt, sin_bt, bias_add, wo, bo, *, n_groups=2):
    B, M, D = x.shape
    BM = B * M
    x_flat = x.reshape(BM, D)
    HD3 = wqkv.shape[1]                       # 3 * H * D
    HD, D_out = wo.shape                      # H * D, d_model
    grp_cols = HD3 // n_groups                # QKV columns per head group
    grp_rows = HD // n_groups                 # W_o rows per head group
    HG = grp_rows // D                        # heads per group

    partials = pl.pallas_call(
        _mha_group_kernel,
        out_shape=jax.ShapeDtypeStruct((n_groups, BM, D_out), jnp.float32),
        grid_spec=pltpu.PrefetchScalarGridSpec(
            num_scalar_prefetch=0,
            grid=(n_groups,),
            in_specs=[
                pl.BlockSpec((BM, D), lambda g: (0, 0)),          # x (resident)
                pl.BlockSpec((D, grp_cols), lambda g: (0, g)),    # W_qkv block
                pl.BlockSpec((BM, D), lambda g: (0, 0)),          # cos (resident)
                pl.BlockSpec((BM, D), lambda g: (0, 0)),          # sin (resident)
                pl.BlockSpec((M, M), lambda g: (0, 0)),           # causal bias
                pl.BlockSpec((grp_rows, D_out), lambda g: (g, 0)),  # W_o block
            ],
            out_specs=pl.BlockSpec((1, BM, D_out), lambda g: (g, 0, 0)),
            scratch_shapes=[
                pltpu.VMEM((BM, grp_cols), jnp.float32),          # qkv
                pltpu.VMEM((HG * B, M, D), jnp.bfloat16),         # q_rot
                pltpu.VMEM((HG * B, M, D), jnp.bfloat16),         # k_rot
                pltpu.VMEM((HG * B, M, D), jnp.bfloat16),         # v
                pltpu.VMEM((BM, grp_rows), jnp.bfloat16),         # cat(heads)
            ]),
        compiler_params=pltpu.CompilerParams(
            dimension_semantics=("parallel",)),   # v7x: 1 head group per TC
    )(x_flat, wqkv, cos_bt, sin_bt, bias_add, wo)

    # Tiny follow-up: sum the two group partials and add the linear bias.
    out = partials.sum(axis=0) + bo[None, :]
    return out.reshape(B, M, D_out)


# ---------------------------------------------------------------------------
# Pure-JAX f32 reference (mirrors the torch module, dropout disabled).
# ---------------------------------------------------------------------------
def reference(x, wq, wk, wv, R, wo_full, bo):
    B, M, D = x.shape
    H = wq.shape[0]
    outs = []
    for h in range(H):
        q = x @ wq[h]
        k = x @ wk[h]
        v = x @ wv[h]
        q_rot = jnp.einsum('bmd,mde->bme', q, R)
        k_rot = jnp.einsum('bmd,mde->bme', k, R)
        s = jnp.einsum('bqd,bkd->bqk', q_rot, k_rot) / math.sqrt(D)
        mask = jnp.tril(jnp.ones((M, M), dtype=bool))
        s = jnp.where(mask[None], s, -jnp.inf)
        p = jax.nn.softmax(s, axis=-1)
        outs.append(jnp.einsum('bqk,bkd->bqd', p, v))
    cat = jnp.concatenate(outs, axis=-1)
    return cat @ wo_full + bo


if __name__ == "__main__":
    # d_model=128, n_heads=8, context_window=16 per the module config; batch=2.
    B, M, D, H = 2, 16, 128, 8
    NG = 2                       # head groups (one per v7x TensorCore)
    HG = H // NG

    key = jax.random.PRNGKey(0)
    ks = jax.random.split(key, 8)
    x = jax.random.normal(ks[0], (B, M, D), dtype=jnp.float32)

    # Deterministic "nn.Linear"-style init (uniform +/- 1/sqrt(fan_in)).
    # Per-head weights stored pre-transposed so q = x @ wq[h].
    b_qkv = 1.0 / math.sqrt(D)
    wq = jax.random.uniform(ks[1], (H, D, D), jnp.float32, -b_qkv, b_qkv)
    wk = jax.random.uniform(ks[2], (H, D, D), jnp.float32, -b_qkv, b_qkv)
    wv = jax.random.uniform(ks[3], (H, D, D), jnp.float32, -b_qkv, b_qkv)
    b_o = 1.0 / math.sqrt(H * D)
    wo_full = jax.random.uniform(ks[4], (H * D, D), jnp.float32, -b_o, b_o)
    bo = jax.random.uniform(ks[5], (D,), jnp.float32, -b_o, b_o)

    # Rotary matrix (torch-identical) factored into per-column cos/sin:
    #   q_rot[j] = q[j] * R[p, j, j] + q[j^1] * R[p, j^1, j].
    R_np = get_rotary_matrix_np(M, D)
    idx = np.arange(D)
    cos_f = R_np[:, idx, idx]          # (M, D)
    sin_f = R_np[:, idx ^ 1, idx]      # (M, D), sign-folded

    # Rotate-half permutation (evens first, then odds) so the in-kernel pair
    # swap is one lane roll by D//2; applied to Wq/Wk columns and cos/sin.
    # It is a bijection on rotated q AND k, so scores are unchanged.
    perm = np.concatenate([np.arange(0, D, 2), np.arange(1, D, 2)])
    cos_bt = jnp.asarray(np.tile(cos_f[:, perm], (B, 1)))   # (B*M, D)
    sin_bt = jnp.asarray(np.tile(sin_f[:, perm], (B, 1)))   # (B*M, D)

    # Precomputed additive causal bias (replaces per-head select in-kernel).
    bias_add = jnp.asarray(
        np.where(np.tril(np.ones((M, M), dtype=bool)), 0.0, -1e30).astype(np.float32))

    # Stacked QKV weights, head-group major:  columns per group g are
    # [q_{g0..g3} | k_{g0..g3} | v_{g0..g3}], each head block D wide.
    wq_p = wq[:, :, perm]
    wk_p = wk[:, :, perm]

    def head_block(w, heads):          # (H, D, D) -> (D, len(heads)*D)
        return jnp.concatenate([w[h] for h in heads], axis=1)

    group_blocks = []
    for g in range(NG):
        heads = list(range(g * HG, (g + 1) * HG))
        group_blocks.append(jnp.concatenate(
            [head_block(wq_p, heads), head_block(wk_p, heads),
             head_block(wv, heads)], axis=1))
    wqkv = jnp.concatenate(group_blocks, axis=1).astype(jnp.bfloat16)  # (D, 3*H*D)
    wo_bf = wo_full.astype(jnp.bfloat16)                               # (H*D, D)

    out = rope_mha(x, wqkv, cos_bt, sin_bt, bias_add, wo_bf, bo, n_groups=NG)
    out = jax.block_until_ready(out)

    ref = reference(x, wq, wk, wv, jnp.asarray(R_np), wo_full, bo)
    err = float(jnp.max(jnp.abs(out - ref)))
    assert out.shape == (B, M, D), out.shape
    # bf16 MXU operands for all matmuls (incl. scores / PV per perf review) and
    # approx reciprocal, vs a pure-f32 reference -> loosened tolerance.
    assert err < 5e-2, f"max abs err {err}"
    print("KERNEL_OK")
</pallas_src>

<mosaic_0001>
module attributes {stable_mosaic.version = 11 : i64} {
  func.func @_mha_group_kernel(%arg0: i32, %arg1: memref<32x128xf32, #tpu.memory_space<vmem>>, %arg2: memref<128x1536xbf16, #tpu.memory_space<vmem>>, %arg3: memref<32x128xf32, #tpu.memory_space<vmem>>, %arg4: memref<32x128xf32, #tpu.memory_space<vmem>>, %arg5: memref<16x16xf32, #tpu.memory_space<vmem>>, %arg6: memref<512x128xbf16, #tpu.memory_space<vmem>>, %arg7: memref<1x32x128xf32, #tpu.memory_space<vmem>>, %arg8: memref<32x1536xf32, #tpu.memory_space<vmem>>, %arg9: memref<8x16x128xbf16, #tpu.memory_space<vmem>>, %arg10: memref<8x16x128xbf16, #tpu.memory_space<vmem>>, %arg11: memref<8x16x128xbf16, #tpu.memory_space<vmem>>, %arg12: memref<32x512xbf16, #tpu.memory_space<vmem>>) attributes {dimension_semantics = [#tpu.dimension_semantics<parallel>], iteration_bounds = array<i64: 2>, scalar_prefetch = 0 : i64, scratch_operands = 5 : i64, tpu.core_type = #tpu.core_type<tc>, window_params = [{pipeline_mode = #tpu.pipeline_mode<synchronous>, transform_indices = @transform_0, window_bounds = array<i64: 32, 128>}, {transform_indices = @transform_1, window_bounds = array<i64: 128, 1536>}, {pipeline_mode = #tpu.pipeline_mode<synchronous>, transform_indices = @transform_2, window_bounds = array<i64: 32, 128>}, {pipeline_mode = #tpu.pipeline_mode<synchronous>, transform_indices = @transform_3, window_bounds = array<i64: 32, 128>}, {pipeline_mode = #tpu.pipeline_mode<synchronous>, transform_indices = @transform_4, window_bounds = array<i64: 16, 16>}, {transform_indices = @transform_5, window_bounds = array<i64: 512, 128>}, {transform_indices = @transform_6, window_bounds = array<i64: 1, 32, 128>}]} {
    %c0 = arith.constant 0 : index
    %c0_0 = arith.constant 0 : index
    %0 = vector.load %arg1[%c0, %c0_0] : memref<32x128xf32, #tpu.memory_space<vmem>>, vector<32x128xf32>
    %1 = arith.truncf %0 : vector<32x128xf32> to vector<32x128xbf16>
    %c0_1 = arith.constant 0 : index
    %c0_2 = arith.constant 0 : index
    %2 = vector.load %arg2[%c0_1, %c0_2] : memref<128x1536xbf16, #tpu.memory_space<vmem>>, vector<128x1536xbf16>
    %cst = arith.constant dense<0.000000e+00> : vector<32x1536xf32>
    %3 = tpu.matmul %1, %2, %cst {dimension_numbers = #tpu.dot_dimension_numbers<[1], [0], [0], [1], [0, 0, 1, 1], [], []>} : vector<32x128xbf16>, vector<128x1536xbf16>, vector<32x1536xf32> -> vector<32x1536xf32>
    %c0_3 = arith.constant 0 : index
    %c0_4 = arith.constant 0 : index
    %4 = vector.load %arg8[%c0_3, %c0_4] : memref<32x1536xf32, #tpu.memory_space<vmem>>, vector<32x1536xf32>
    tpu.vector_store %arg8[%c0_3, %c0_4], %3 {strides = array<i32>} : memref<32x1536xf32, #tpu.memory_space<vmem>>, vector<32x1536xf32>,
    %c0_5 = arith.constant 0 : index
    %c0_6 = arith.constant 0 : index
    %5 = vector.load %arg3[%c0_5, %c0_6] : memref<32x128xf32, #tpu.memory_space<vmem>>, vector<32x128xf32>
    %c0_7 = arith.constant 0 : index
    %c0_8 = arith.constant 0 : index
    %6 = vector.load %arg4[%c0_7, %c0_8] : memref<32x128xf32, #tpu.memory_space<vmem>>, vector<32x128xf32>
    %c0_9 = arith.constant 0 : index
    %c0_10 = arith.constant 0 : index
    %7 = vector.load %arg8[%c0_9, %c0_10] : memref<32x1536xf32, #tpu.memory_space<vmem>>, vector<32x128xf32>
    %c0_11 = arith.constant 0 : index
    %c512 = arith.constant 512 : index
    %8 = vector.load %arg8[%c0_11, %c512] : memref<32x1536xf32, #tpu.memory_space<vmem>>, vector<32x128xf32>
    %c0_12 = arith.constant 0 : index
    %c1024 = arith.constant 1024 : index
    %9 = vector.load %arg8[%c0_12, %c1024] : memref<32x1536xf32, #tpu.memory_space<vmem>>, vector<32x128xf32>
    %10 = arith.mulf %7, %5 : vector<32x128xf32>
    %c64_i32 = arith.constant 64 : i32
    %11 = tpu.dynamic_rotate %7 by %c64_i32 dim 1 : vector<32x128xf32>, i32 -> vector<32x128xf32>
    %12 = arith.mulf %11, %6 : vector<32x128xf32>
    %13 = arith.addf %10, %12 : vector<32x128xf32>
    %14 = arith.mulf %8, %5 : vector<32x128xf32>
    %c64_i32_13 = arith.constant 64 : i32
    %15 = tpu.dynamic_rotate %8 by %c64_i32_13 dim 1 : vector<32x128xf32>, i32 -> vector<32x128xf32>
    %16 = arith.mulf %15, %6 : vector<32x128xf32>
    %17 = arith.addf %14, %16 : vector<32x128xf32>
    %18 = vector.shape_cast %13 : vector<32x128xf32> to vector<2x16x128xf32>
    %19 = arith.truncf %18 : vector<2x16x128xf32> to vector<2x16x128xbf16>
    %c0_14 = arith.constant 0 : index
    %c0_15 = arith.constant 0 : index
    %c0_16 = arith.constant 0 : index
    %20 = vector.load %arg9[%c0_14, %c0_15, %c0_16] : memref<8x16x128xbf16, #tpu.memory_space<vmem>>, vector<2x16x128xbf16>
    tpu.vector_store %arg9[%c0_14, %c0_15, %c0_16], %19 {strides = array<i32>} : memref<8x16x128xbf16, #tpu.memory_space<vmem>>, vector<2x16x128xbf16>,
    %21 = vector.shape_cast %17 : vector<32x128xf32> to vector<2x16x128xf32>
    %22 = arith.truncf %21 : vector<2x16x128xf32> to vector<2x16x128xbf16>
    %c0_17 = arith.constant 0 : index
    %c0_18 = arith.constant 0 : index
    %c0_19 = arith.constant 0 : index
    %23 = vector.load %arg10[%c0_17, %c0_18, %c0_19] : memref<8x16x128xbf16, #tpu.memory_space<vmem>>, vector<2x16x128xbf16>
    tpu.vector_store %arg10[%c0_17, %c0_18, %c0_19], %22 {strides = array<i32>} : memref<8x16x128xbf16, #tpu.memory_space<vmem>>, vector<2x16x128xbf16>,
    %24 = vector.shape_cast %9 : vector<32x128xf32> to vector<2x16x128xf32>
    %25 = arith.truncf %24 : vector<2x16x128xf32> to vector<2x16x128xbf16>
    %c0_20 = arith.constant 0 : index
    %c0_21 = arith.constant 0 : index
    %c0_22 = arith.constant 0 : index
    %26 = vector.load %arg11[%c0_20, %c0_21, %c0_22] : memref<8x16x128xbf16, #tpu.memory_space<vmem>>, vector<2x16x128xbf16>
    tpu.vector_store %arg11[%c0_20, %c0_21, %c0_22], %25 {strides = array<i32>} : memref<8x16x128xbf16, #tpu.memory_space<vmem>>, vector<2x16x128xbf16>,
    %c0_23 = arith.constant 0 : index
    %c128 = arith.constant 128 : index
    %27 = vector.load %arg8[%c0_23, %c128] : memref<32x1536xf32, #tpu.memory_space<vmem>>, vector<32x128xf32>
    %c0_24 = arith.constant 0 : index
    %c640 = arith.constant 640 : index
    %28 = vector.load %arg8[%c0_24, %c640] : memref<32x1536xf32, #tpu.memory_space<vmem>>, vector<32x128xf32>
    %c0_25 = arith.constant 0 : index
    %c1152 = arith.constant 1152 : index
    %29 = vector.load %arg8[%c0_25, %c1152] : memref<32x1536xf32, #tpu.memory_space<vmem>>, vector<32x128xf32>
    %30 = arith.mulf %27, %5 : vector<32x128xf32>
    %c64_i32_26 = arith.constant 64 : i32
    %31 = tpu.dynamic_rotate %27 by %c64_i32_26 dim 1 : vector<32x128xf32>, i32 -> vector<32x128xf32>
    %32 = arith.mulf %31, %6 : vector<32x128xf32>
    %33 = arith.addf %30, %32 : vector<32x128xf32>
    %34 = arith.mulf %28, %5 : vector<32x128xf32>
    %c64_i32_27 = arith.constant 64 : i32
    %35 = tpu.dynamic_rotate %28 by %c64_i32_27 dim 1 : vector<32x128xf32>, i32 -> vector<32x128xf32>
    %36 = arith.mulf %35, %6 : vector<32x128xf32>
    %37 = arith.addf %34, %36 : vector<32x128xf32>
    %38 = vector.shape_cast %33 : vector<32x128xf32> to vector<2x16x128xf32>
    %39 = arith.truncf %38 : vector<2x16x128xf32> to vector<2x16x128xbf16>
    %c2 = arith.constant 2 : index
    %c0_28 = arith.constant 0 : index
    %c0_29 = arith.constant 0 : index
    %40 = vector.load %arg9[%c2, %c0_28, %c0_29] : memref<8x16x128xbf16, #tpu.memory_space<vmem>>, vector<2x16x128xbf16>
    tpu.vector_store %arg9[%c2, %c0_28, %c0_29], %39 {strides = array<i32>} : memref<8x16x128xbf16, #tpu.memory_space<vmem>>, vector<2x16x128xbf16>,
    %41 = vector.shape_cast %37 : vector<32x128xf32> to vector<2x16x128xf32>
    %42 = arith.truncf %41 : vector<2x16x128xf32> to vector<2x16x128xbf16>
    %c2_30 = arith.constant 2 : index
    %c0_31 = arith.constant 0 : index
    %c0_32 = arith.constant 0 : index
    %43 = vector.load %arg10[%c2_30, %c0_31, %c0_32] : memref<8x16x128xbf16, #tpu.memory_space<vmem>>, vector<2x16x128xbf16>
    tpu.vector_store %arg10[%c2_30, %c0_31, %c0_32], %42 {strides = array<i32>} : memref<8x16x128xbf16, #tpu.memory_space<vmem>>, vector<2x16x128xbf16>,
    %44 = vector.shape_cast %29 : vector<32x128xf32> to vector<2x16x128xf32>
    %45 = arith.truncf %44 : vector<2x16x128xf32> to vector<2x16x128xbf16>
    %c2_33 = arith.constant 2 : index
    %c0_34 = arith.constant 0 : index
    %c0_35 = arith.constant 0 : index
    %46 = vector.load %arg11[%c2_33, %c0_34, %c0_35] : memref<8x16x128xbf16, #tpu.memory_space<vmem>>, vector<2x16x128xbf16>
    tpu.vector_store %arg11[%c2_33, %c0_34, %c0_35], %45 {strides = array<i32>} : memref<8x16x128xbf16, #tpu.memory_space<vmem>>, vector<2x16x128xbf16>,
    %c0_36 = arith.constant 0 : index
    %c256 = arith.constant 256 : index
    %47 = vector.load %arg8[%c0_36, %c256] : memref<32x1536xf32, #tpu.memory_space<vmem>>, vector<32x128xf32>
    %c0_37 = arith.constant 0 : index
    %c768 = arith.constant 768 : index
    %48 = vector.load %arg8[%c0_37, %c768] : memref<32x1536xf32, #tpu.memory_space<vmem>>, vector<32x128xf32>
    %c0_38 = arith.constant 0 : index
    %c1280 = arith.constant 1280 : index
    %49 = vector.load %arg8[%c0_38, %c1280] : memref<32x1536xf32, #tpu.memory_space<vmem>>, vector<32x128xf32>
    %50 = arith.mulf %47, %5 : vector<32x128xf32>
    %c64_i32_39 = arith.constant 64 : i32
    %51 = tpu.dynamic_rotate %47 by %c64_i32_39 dim 1 : vector<32x128xf32>, i32 -> vector<32x128xf32>
    %52 = arith.mulf %51, %6 : vector<32x128xf32>
    %53 = arith.addf %50, %52 : vector<32x128xf32>
    %54 = arith.mulf %48, %5 : vector<32x128xf32>
    %c64_i32_40 = arith.constant 64 : i32
    %55 = tpu.dynamic_rotate %48 by %c64_i32_40 dim 1 : vector<32x128xf32>, i32 -> vector<32x128xf32>
    %56 = arith.mulf %55, %6 : vector<32x128xf32>
    %57 = arith.addf %54, %56 : vector<32x128xf32>
    %58 = vector.shape_cast %53 : vector<32x128xf32> to vector<2x16x128xf32>
    %59 = arith.truncf %58 : vector<2x16x128xf32> to vector<2x16x128xbf16>
    %c4 = arith.constant 4 : index
    %c0_41 = arith.constant 0 : index
    %c0_42 = arith.constant 0 : index
    %60 = vector.load %arg9[%c4, %c0_41, %c0_42] : memref<8x16x128xbf16, #tpu.memory_space<vmem>>, vector<2x16x128xbf16>
    tpu.vector_store %arg9[%c4, %c0_41, %c0_42], %59 {strides = array<i32>} : memref<8x16x128xbf16, #tpu.memory_space<vmem>>, vector<2x16x128xbf16>,
    %61 = vector.shape_cast %57 : vector<32x128xf32> to vector<2x16x128xf32>
    %62 = arith.truncf %61 : vector<2x16x128xf32> to vector<2x16x128xbf16>
    %c4_43 = arith.constant 4 : index
    %c0_44 = arith.constant 0 : index
    %c0_45 = arith.constant 0 : index
    %63 = vector.load %arg10[%c4_43, %c0_44, %c0_45] : memref<8x16x128xbf16, #tpu.memory_space<vmem>>, vector<2x16x128xbf16>
    tpu.vector_store %arg10[%c4_43, %c0_44, %c0_45], %62 {strides = array<i32>} : memref<8x16x128xbf16, #tpu.memory_space<vmem>>, vector<2x16x128xbf16>,
    %64 = vector.shape_cast %49 : vector<32x128xf32> to vector<2x16x128xf32>
    %65 = arith.truncf %64 : vector<2x16x128xf32> to vector<2x16x128xbf16>
    %c4_46 = arith.constant 4 : index
    %c0_47 = arith.constant 0 : index
    %c0_48 = arith.constant 0 : index
    %66 = vector.load %arg11[%c4_46, %c0_47, %c0_48] : memref<8x16x128xbf16, #tpu.memory_space<vmem>>, vector<2x16x128xbf16>
    tpu.vector_store %arg11[%c4_46, %c0_47, %c0_48], %65 {strides = array<i32>} : memref<8x16x128xbf16, #tpu.memory_space<vmem>>, vector<2x16x128xbf16>,
    %c0_49 = arith.constant 0 : index
    %c384 = arith.constant 384 : index
    %67 = vector.load %arg8[%c0_49, %c384] : memref<32x1536xf32, #tpu.memory_space<vmem>>, vector<32x128xf32>
    %c0_50 = arith.constant 0 : index
    %c896 = arith.constant 896 : index
    %68 = vector.load %arg8[%c0_50, %c896] : memref<32x1536xf32, #tpu.memory_space<vmem>>, vector<32x128xf32>
    %c0_51 = arith.constant 0 : index
    %c1408 = arith.constant 1408 : index
    %69 = vector.load %arg8[%c0_51, %c1408] : memref<32x1536xf32, #tpu.memory_space<vmem>>, vector<32x128xf32>
    %70 = arith.mulf %67, %5 : vector<32x128xf32>
    %c64_i32_52 = arith.constant 64 : i32
    %71 = tpu.dynamic_rotate %67 by %c64_i32_52 dim 1 : vector<32x128xf32>, i32 -> vector<32x128xf32>
    %72 = arith.mulf %71, %6 : vector<32x128xf32>
    %73 = arith.addf %70, %72 : vector<32x128xf32>
    %74 = arith.mulf %68, %5 : vector<32x128xf32>
    %c64_i32_53 = arith.constant 64 : i32
    %75 = tpu.dynamic_rotate %68 by %c64_i32_53 dim 1 : vector<32x128xf32>, i32 -> vector<32x128xf32>
    %76 = arith.mulf %75, %6 : vector<32x128xf32>
    %77 = arith.addf %74, %76 : vector<32x128xf32>
    %78 = vector.shape_cast %73 : vector<32x128xf32> to vector<2x16x128xf32>
    %79 = arith.truncf %78 : vector<2x16x128xf32> to vector<2x16x128xbf16>
    %c6 = arith.constant 6 : index
    %c0_54 = arith.constant 0 : index
    %c0_55 = arith.constant 0 : index
    %80 = vector.load %arg9[%c6, %c0_54, %c0_55] : memref<8x16x128xbf16, #tpu.memory_space<vmem>>, vector<2x16x128xbf16>
    tpu.vector_store %arg9[%c6, %c0_54, %c0_55], %79 {strides = array<i32>} : memref<8x16x128xbf16, #tpu.memory_space<vmem>>, vector<2x16x128xbf16>,
    %81 = vector.shape_cast %77 : vector<32x128xf32> to vector<2x16x128xf32>
    %82 = arith.truncf %81 : vector<2x16x128xf32> to vector<2x16x128xbf16>
    %c6_56 = arith.constant 6 : index
    %c0_57 = arith.constant 0 : index
    %c0_58 = arith.constant 0 : index
    %83 = vector.load %arg10[%c6_56, %c0_57, %c0_58] : memref<8x16x128xbf16, #tpu.memory_space<vmem>>, vector<2x16x128xbf16>
    tpu.vector_store %arg10[%c6_56, %c0_57, %c0_58], %82 {strides = array<i32>} : memref<8x16x128xbf16, #tpu.memory_space<vmem>>, vector<2x16x128xbf16>,
    %84 = vector.shape_cast %69 : vector<32x128xf32> to vector<2x16x128xf32>
    %85 = arith.truncf %84 : vector<2x16x128xf32> to vector<2x16x128xbf16>
    %c6_59 = arith.constant 6 : index
    %c0_60 = arith.constant 0 : index
    %c0_61 = arith.constant 0 : index
    %86 = vector.load %arg11[%c6_59, %c0_60, %c0_61] : memref<8x16x128xbf16, #tpu.memory_space<vmem>>, vector<2x16x128xbf16>
    tpu.vector_store %arg11[%c6_59, %c0_60, %c0_61], %85 {strides = array<i32>} : memref<8x16x128xbf16, #tpu.memory_space<vmem>>, vector<2x16x128xbf16>,
    %c0_62 = arith.constant 0 : index
    %c0_63 = arith.constant 0 : index
    %c0_64 = arith.constant 0 : index
    %87 = vector.load %arg9[%c0_62, %c0_63, %c0_64] : memref<8x16x128xbf16, #tpu.memory_space<vmem>>, vector<8x16x128xbf16>
    %c0_65 = arith.constant 0 : index
    %c0_66 = arith.constant 0 : index
    %c0_67 = arith.constant 0 : index
    %88 = vector.load %arg10[%c0_65, %c0_66, %c0_67] : memref<8x16x128xbf16, #tpu.memory_space<vmem>>, vector<8x16x128xbf16>
    "tpu.trace_start"() <{level = 10 : i32, message = "gqd,gkd->gqk"}> : () -> ()
    %cst_68 = arith.constant dense<0.000000e+00> : vector<8x16x16xf32>
    %89 = tpu.matmul %87, %88, %cst_68 {dimension_numbers = #tpu.dot_dimension_numbers<[2], [2], [1], [1], [0, 0, 0, 1, 1, 1], [0], [0]>} : vector<8x16x128xbf16>, vector<8x16x128xbf16>, vector<8x16x16xf32> -> vector<8x16x16xf32>
    "tpu.trace_stop"() : () -> ()
    %cst_69 = arith.constant 0.0883883461 : f32
    %90 = vector.broadcast %cst_69 : f32 to vector<8x16x16xf32>
    %91 = arith.mulf %89, %90 : vector<8x16x16xf32>
    %c0_70 = arith.constant 0 : index
    %c0_71 = arith.constant 0 : index
    %92 = vector.load %arg5[%c0_70, %c0_71] : memref<16x16xf32, #tpu.memory_space<vmem>>, vector<16x16xf32>
    %93 = vector.shape_cast %92 : vector<16x16xf32> to vector<1x16x16xf32>
    %94 = vector.broadcast %93 : vector<1x16x16xf32> to vector<8x16x16xf32>
    %95 = arith.addf %91, %94 : vector<8x16x16xf32>
    %cst_72 = arith.constant dense<0xFF800000> : vector<8x16xf32>
    %96 = vector.multi_reduction <maximumf>, %95, %cst_72 [2] : vector<8x16x16xf32> to vector<8x16xf32>
    %97 = vector.shape_cast %96 : vector<8x16xf32> to vector<8x16x1xf32>
    %98 = vector.broadcast %97 : vector<8x16x1xf32> to vector<8x16x16xf32>
    %99 = arith.subf %95, %98 : vector<8x16x16xf32>
    %100 = math.exp %99 : vector<8x16x16xf32>
    %cst_73 = arith.constant dense<0.000000e+00> : vector<8x16xf32>
    %101 = vector.multi_reduction <add>, %100, %cst_73 [2] : vector<8x16x16xf32> to vector<8x16xf32>
    %102 = vector.shape_cast %101 : vector<8x16xf32> to vector<8x16x1xf32>
    %103 = tpu.reciprocal %102 {approx = true} : vector<8x16x1xf32> -> vector<8x16x1xf32>
    %104 = vector.broadcast %103 : vector<8x16x1xf32> to vector<8x16x16xf32>
    %105 = arith.mulf %100, %104 : vector<8x16x16xf32>
    %106 = arith.truncf %105 : vector<8x16x16xf32> to vector<8x16x16xbf16>
    %c0_74 = arith.constant 0 : index
    %c0_75 = arith.constant 0 : index
    %c0_76 = arith.constant 0 : index
    %107 = vector.load %arg11[%c0_74, %c0_75, %c0_76] : memref<8x16x128xbf16, #tpu.memory_space<vmem>>, vector<8x16x128xbf16>
    "tpu.trace_start"() <{level = 10 : i32, message = "gqk,gkd->gqd"}> : () -> ()
    %cst_77 = arith.constant dense<0.000000e+00> : vector<8x16x128xf32>
    %108 = tpu.matmul %106, %107, %cst_77 {dimension_numbers = #tpu.dot_dimension_numbers<[2], [1], [1], [2], [0, 0, 0, 1, 1, 2], [0], [0]>} : vector<8x16x16xbf16>, vector<8x16x128xbf16>, vector<8x16x128xf32> -> vector<8x16x128xf32>
    "tpu.trace_stop"() : () -> ()
    %109 = vector.extract_strided_slice %108 {offsets = [0, 0, 0], sizes = [2, 16, 128], strides = [1, 1, 1]} : vector<8x16x128xf32> to vector<2x16x128xf32>
    %110 = vector.shape_cast %109 : vector<2x16x128xf32> to vector<32x128xf32>
    %111 = arith.truncf %110 : vector<32x128xf32> to vector<32x128xbf16>
    %c0_78 = arith.constant 0 : index
    %c0_79 = arith.constant 0 : index
    %112 = vector.load %arg12[%c0_78, %c0_79] : memref<32x512xbf16, #tpu.memory_space<vmem>>, vector<32x128xbf16>
    tpu.vector_store %arg12[%c0_78, %c0_79], %111 {strides = array<i32>} : memref<32x512xbf16, #tpu.memory_space<vmem>>, vector<32x128xbf16>,
    %113 = vector.extract_strided_slice %108 {offsets = [2, 0, 0], sizes = [2, 16, 128], strides = [1, 1, 1]} : vector<8x16x128xf32> to vector<2x16x128xf32>
    %114 = vector.shape_cast %113 : vector<2x16x128xf32> to vector<32x128xf32>
    %115 = arith.truncf %114 : vector<32x128xf32> to vector<32x128xbf16>
    %c0_80 = arith.constant 0 : index
    %c128_81 = arith.constant 128 : index
    %116 = vector.load %arg12[%c0_80, %c128_81] : memref<32x512xbf16, #tpu.memory_space<vmem>>, vector<32x128xbf16>
    tpu.vector_store %arg12[%c0_80, %c128_81], %115 {strides = array<i32>} : memref<32x512xbf16, #tpu.memory_space<vmem>>, vector<32x128xbf16>,
    %117 = vector.extract_strided_slice %108 {offsets = [4, 0, 0], sizes = [2, 16, 128], strides = [1, 1, 1]} : vector<8x16x128xf32> to vector<2x16x128xf32>
    %118 = vector.shape_cast %117 : vector<2x16x128xf32> to vector<32x128xf32>
    %119 = arith.truncf %118 : vector<32x128xf32> to vector<32x128xbf16>
    %c0_82 = arith.constant 0 : index
    %c256_83 = arith.constant 256 : index
    %120 = vector.load %arg12[%c0_82, %c256_83] : memref<32x512xbf16, #tpu.memory_space<vmem>>, vector<32x128xbf16>
    tpu.vector_store %arg12[%c0_82, %c256_83], %119 {strides = array<i32>} : memref<32x512xbf16, #tpu.memory_space<vmem>>, vector<32x128xbf16>,
    %121 = vector.extract_strided_slice %108 {offsets = [6, 0, 0], sizes = [2, 16, 128], strides = [1, 1, 1]} : vector<8x16x128xf32> to vector<2x16x128xf32>
    %122 = vector.shape_cast %121 : vector<2x16x128xf32> to vector<32x128xf32>
    %123 = arith.truncf %122 : vector<32x128xf32> to vector<32x128xbf16>
    %c0_84 = arith.constant 0 : index
    %c384_85 = arith.constant 384 : index
    %124 = vector.load %arg12[%c0_84, %c384_85] : memref<32x512xbf16, #tpu.memory_space<vmem>>, vector<32x128xbf16>
    tpu.vector_store %arg12[%c0_84, %c384_85], %123 {strides = array<i32>} : memref<32x512xbf16, #tpu.memory_space<vmem>>, vector<32x128xbf16>,
    %c0_86 = arith.constant 0 : index
    %c0_87 = arith.constant 0 : index
    %125 = vector.load %arg12[%c0_86, %c0_87] : memref<32x512xbf16, #tpu.memory_space<vmem>>, vector<32x512xbf16>
    %c0_88 = arith.constant 0 : index
    %c0_89 = arith.constant 0 : index
    %126 = vector.load %arg6[%c0_88, %c0_89] : memref<512x128xbf16, #tpu.memory_space<vmem>>, vector<512x128xbf16>
    %cst_90 = arith.constant dense<0.000000e+00> : vector<32x128xf32>
    %127 = tpu.matmul %125, %126, %cst_90 {dimension_numbers = #tpu.dot_dimension_numbers<[1], [0], [0], [1], [0, 0, 1, 1], [], []>} : vector<32x512xbf16>, vector<512x128xbf16>, vector<32x128xf32> -> vector<32x128xf32>
    %128 = vector.shape_cast %127 : vector<32x128xf32> to vector<1x32x128xf32>
    %c0_91 = arith.constant 0 : index
    %c0_92 = arith.constant 0 : index
    %c0_93 = arith.constant 0 : index
    %129 = vector.load %arg7[%c0_91, %c0_92, %c0_93] : memref<1x32x128xf32, #tpu.memory_space<vmem>>, vector<1x32x128xf32>
    tpu.vector_store %arg7[%c0_91, %c0_92, %c0_93], %128 {strides = array<i32>} : memref<1x32x128xf32, #tpu.memory_space<vmem>>, vector<1x32x128xf32>,
    return
  }
  func.func @transform_0(%arg0: i32) -> (i32, i32) {
    %c0_i32 = arith.constant 0 : i32
    %c0_i32_0 = arith.constant 0 : i32
    %c0_i32_1 = arith.constant 0 : i32
    return %c0_i32, %c0_i32_0 : i32, i32
  }
  func.func @transform_1(%arg0: i32) -> (i32, i32) {
    %c0_i32 = arith.constant 0 : i32
    %c0_i32_0 = arith.constant 0 : i32
    return %c0_i32, %arg0 : i32, i32
  }
  func.func @transform_2(%arg0: i32) -> (i32, i32) {
    %c0_i32 = arith.constant 0 : i32
    %c0_i32_0 = arith.constant 0 : i32
    %c0_i32_1 = arith.constant 0 : i32
    return %c0_i32, %c0_i32_0 : i32, i32
  }
  func.func @transform_3(%arg0: i32) -> (i32, i32) {
    %c0_i32 = arith.constant 0 : i32
    %c0_i32_0 = arith.constant 0 : i32
    %c0_i32_1 = arith.constant 0 : i32
    return %c0_i32, %c0_i32_0 : i32, i32
  }
  func.func @transform_4(%arg0: i32) -> (i32, i32) {
    %c0_i32 = arith.constant 0 : i32
    %c0_i32_0 = arith.constant 0 : i32
    %c0_i32_1 = arith.constant 0 : i32
    return %c0_i32, %c0_i32_0 : i32, i32
  }
  func.func @transform_5(%arg0: i32) -> (i32, i32) {
    %c0_i32 = arith.constant 0 : i32
    %c0_i32_0 = arith.constant 0 : i32
    return %arg0, %c0_i32 : i32, i32
  }
  func.func @transform_6(%arg0: i32) -> (i32, i32, i32) {
    %c0_i32 = arith.constant 0 : i32
    %c0_i32_0 = arith.constant 0 : i32
    %c0_i32_1 = arith.constant 0 : i32
    return %arg0, %c0_i32, %c0_i32_0 : i32, i32, i32
  }
}

</mosaic_0001>

<llo_original>
// kernel: tpu_custom_call.1
$region0: #{tpu_custom_call.1}
  #allocation0 [shape = 'u32[]', space=smem, size = 0x4, offset = 0x4, fixed_abs, tag = 'smem constant byte address 0x4 - core index']
  #allocation1 [shape = 'u32[72,128]{1,0:T(1,128)}', space=vmem, size = 0x9000, scoped, tag = 'internal scratch']
  #allocation2 [shape = 'f32[32,1536]{1,0:T(8,128)}', space=vmem, size = 0x30000, scoped, tag = 'scratch operand']
  #allocation3 [shape = 'bf16[8,16,128]{2,1,0:T(8,128)(2,1)}', space=vmem, size = 0x8000, scoped, tag = 'scratch operand']
  #allocation4 [shape = 'bf16[8,16,128]{2,1,0:T(8,128)(2,1)}', space=vmem, size = 0x8000, scoped, tag = 'scratch operand']
  #allocation5 [shape = 'bf16[8,16,128]{2,1,0:T(8,128)(2,1)}', space=vmem, size = 0x8000, scoped, tag = 'scratch operand']
  #allocation6 [shape = 'bf16[32,512]{1,0:T(8,128)(2,1)}', space=vmem, size = 0x8000, scoped, tag = 'scratch operand']
  %s0 = inlined_call_operand.hbm [shape: f32[32,128], index: 0, kind: input, shape index: {}]
  %s1 = inlined_call_operand.hbm [shape: bf16[128,3072], index: 1, kind: input, shape index: {}]
  %s2 = inlined_call_operand.hbm [shape: f32[32,128], index: 2, kind: input, shape index: {}]
  %s3 = inlined_call_operand.hbm [shape: f32[32,128], index: 3, kind: input, shape index: {}]
  %s4 = inlined_call_operand.hbm [shape: f32[16,16], index: 4, kind: input, shape index: {}]
  %s5 = inlined_call_operand.hbm [shape: bf16[1024,128], index: 5, kind: input, shape index: {}]
  %s6 = inlined_call_operand.hbm [shape: f32[2,32,128], index: 6, kind: output, shape index: {}]
  %s7 = sld [smem:[#allocation0]]
  $region81: #{tpu_custom_call.1} parent=0
    _
  %s9 = ssub.s32 1, %s7
  %s10 = scalar_select 0, %s9, %s7
  $region1: #{tpu_custom_call.1} parent=0
    #allocation7 [shape = 'u8[16384]{0}', space=vmem, size = 0x4000, scoped, tag = 'input window, operand 0, single buffered']
    #allocation8 [shape = 's32[2]{0}', space=sflag, size = 0x8, scoped, tag = 'scoped memory for tpu_custom_call.1']
    #allocation9 [shape = 's32[2]{0}', space=sflag, size = 0x8, scoped, tag = 'scoped memory for tpu_custom_call.1']
    #allocation10 [shape = 'u8[786432]{0}', space=vmem, size = 0xc0000, scoped, tag = 'input window, operand 1']
    #allocation11 [shape = 's32[2]{0}', space=sflag, size = 0x8, scoped, tag = 'scoped memory for tpu_custom_call.1']
    #allocation12 [shape = 'u8[16384]{0}', space=vmem, size = 0x4000, scoped, tag = 'input window, operand 2, single buffered']
    #allocation13 [shape = 'u8[16384]{0}', space=vmem, size = 0x4000, scoped, tag = 'input window, operand 3, single buffered']
    #allocation14 [shape = 's32[1]{0}', space=sflag, size = 0x4, scoped, tag = 'scoped memory for tpu_custom_call.1']
    #allocation15 [shape = 'u8[8192]{0}', space=vmem, size = 0x2000, scoped, tag = 'input window, operand 4, single buffered']
    #allocation16 [shape = 'u8[262144]{0}', space=vmem, size = 0x40000, scoped, tag = 'input window, operand 5']
    #allocation17 [shape = 's32[2]{0}', space=sflag, size = 0x8, scoped, tag = 'scoped memory for tpu_custom_call.1']
    #allocation18 [shape = 'u8[32768]{0}', space=vmem, size = 0x8000, scoped, tag = 'output window, operand 0']
    %11 = vsyncpa [#allocation8], 0
    %12 = vsyncpa [#allocation11], 0
    %s13 = scalar_lea.sflag [#allocation11], 1
    %14 = vsyncpa %s13, 0
    %15 = vsyncpa [#allocation14], 0
    %16 = vsyncpa [#allocation17], 0
    %s17 = scalar_lea.sflag [#allocation17], 1
    %18 = vsyncpa %s17, 0
    %19 = vsyncpa [#allocation9], 0
    %s20 = scalar_lea.sflag [#allocation9], 1
    %21 = vsyncpa %s20, 0
    loop: start=0, step=1, limit=4
    $region2: #{tpu_custom_call.1} parent=1 // loop_pre_header
      _
    $region3: #{tpu_custom_call.1} parent=1 // loop_header
      %s23 = sphi 0, %s27
      %p24 = scmp.ge.s32.totalorder %s23, 4
      %s31 = sphi 0, %s31
      %s33 = sphi 0, %s31
      %s34 = sphi 0, %s33
      %s48 = sphi 0, %s34
      %s54 = sphi 0, %s56
      %s57 = sphi 0, %s54
      %s58 = sphi 0, %s57
      %s74 = sphi 0, %s58
      %s78 = sphi 0, %s78
      %s80 = sphi 0, %s78
      %s81 = sphi 0, %s80
      %s95 = sphi 0, %s81
      %s99 = sphi 0, %s99
      %s101 = sphi 0, %s99
      %s102 = sphi 0, %s101
      %s116 = sphi 0, %s102
      %s120 = sphi 0, %s120
      %s122 = sphi 0, %s120
      %s123 = sphi 0, %s122
      %s137 = sphi 0, %s123
      %s143 = sphi 0, %s145
      %s146 = sphi 0, %s143
      %s147 = sphi 0, %s146
      %s163 = sphi 0, %s147
      %s169 = sphi 0, %s171
      %s172 = sphi 0, %s169
      %s173 = sphi 0, %s172
      %s189 = sphi 0, %s173
    $region4: #{tpu_custom_call.1} parent=1 // loop_header_branch
      %26 = sbr.rel (%p24) target = $region8
    $region5: #{tpu_custom_call.1} parent=1 // loop_body
      %s28 = ssub.s32 %s23, 1
      %s29 = ssub.s32 %s23, 2
      %s30 = sadd.s32 %s23, 1
      %s32 = sadd.s32 %s31, 1
      %p35 = scmp.eq.s32.totalorder %s23, 1
      %p36 = scmp.ne.s32.totalorder %s31, %s33
      %p37 = scmp.eq.s32.totalorder %s23, 0
      %p38 = por %p36, %p37
      %p39 = scmp.ne.s32.totalorder %s31, %s33
      %p40 = scmp.eq.s32.totalorder %s28, 1
      %p41 = por %p39, %p40
      %p42 = scmp.ne.s32.totalorder %s33, %s34
      %p43 = scmp.eq.s32.totalorder %s28, 0
      %p44 = por %p42, %p43
      %p45 = scmp.ne.s32.totalorder %s33, %s34
      %p46 = scmp.eq.s32.totalorder %s29, 1
      %p47 = por %p45, %p46
      %p49 = scmp.ne.s32.totalorder %s34, %s48
      %p50 = scmp.eq.s32.totalorder %s29, 0
      %p51 = por %p49, %p50
      %s52 = ssub.s32 %s23, %s30
      %p53 = scmp.eq.s32.totalorder %s52, 0
      %s55 = sadd.s32 %s54, 1
      %s56 = scalar_select %p53, %s54, %s55
      %p59 = pneg %p53
      %p60 = scmp.eq.s32.totalorder %s23, 1
      %p61 = por %p59, %p60
      %p62 = scmp.ne.s32.totalorder %s54, %s57
      %p63 = scmp.eq.s32.totalorder %s23, 0
      %p64 = por %p62, %p63
      %p65 = scmp.ne.s32.totalorder %s54, %s57
      %p66 = scmp.eq.s32.totalorder %s28, 1
      %p67 = por %p65, %p66
      %p68 = scmp.ne.s32.totalorder %s57, %s58
      %p69 = scmp.eq.s32.totalorder %s28, 0
      %p70 = por %p68, %p69
      %p71 = scmp.ne.s32.totalorder %s57, %s58
      %p72 = scmp.eq.s32.totalorder %s29, 1
      %p73 = por %p71, %p72
      %p75 = scmp.ne.s32.totalorder %s58, %s74
      %p76 = scmp.eq.s32.totalorder %s29, 0
      %p77 = por %p75, %p76
      %s79 = sadd.s32 %s78, 1
      %p82 = scmp.eq.s32.totalorder %s23, 1
      %p83 = scmp.ne.s32.totalorder %s78, %s80
      %p84 = scmp.eq.s32.totalorder %s23, 0
      %p85 = por %p83, %p84
      %p86 = scmp.ne.s32.totalorder %s78, %s80
      %p87 = scmp.eq.s32.totalorder %s28, 1
      %p88 = por %p86, %p87
      %p89 = scmp.ne.s32.totalorder %s80, %s81
      %p90 = scmp.eq.s32.totalorder %s28, 0
      %p91 = por %p89, %p90
      %p92 = scmp.ne.s32.totalorder %s80, %s81
      %p93 = scmp.eq.s32.totalorder %s29, 1
      %p94 = por %p92, %p93
      %p96 = scmp.ne.s32.totalorder %s81, %s95
      %p97 = scmp.eq.s32.totalorder %s29, 0
      %p98 = por %p96, %p97
      %s100 = sadd.s32 %s99, 1
      %p103 = scmp.eq.s32.totalorder %s23, 1
      %p104 = scmp.ne.s32.totalorder %s99, %s101
      %p105 = scmp.eq.s32.totalorder %s23, 0
      %p106 = por %p104, %p105
      %p107 = scmp.ne.s32.totalorder %s99, %s101
      %p108 = scmp.eq.s32.totalorder %s28, 1
      %p109 = por %p107, %p108
      %p110 = scmp.ne.s32.totalorder %s101, %s102
      %p111 = scmp.eq.s32.totalorder %s28, 0
      %p112 = por %p110, %p111
      %p113 = scmp.ne.s32.totalorder %s101, %s102
      %p114 = scmp.eq.s32.totalorder %s29, 1
      %p115 = por %p113, %p114
      %p117 = scmp.ne.s32.totalorder %s102, %s116
      %p118 = scmp.eq.s32.totalorder %s29, 0
      %p119 = por %p117, %p118
      %s121 = sadd.s32 %s120, 1
      %p124 = scmp.eq.s32.totalorder %s23, 1
      %p125 = scmp.ne.s32.totalorder %s120, %s122
      %p126 = scmp.eq.s32.totalorder %s23, 0
      %p127 = por %p125, %p126
      %p128 = scmp.ne.s32.totalorder %s120, %s122
      %p129 = scmp.eq.s32.totalorder %s28, 1
      %p130 = por %p128, %p129
      %p131 = scmp.ne.s32.totalorder %s122, %s123
      %p132 = scmp.eq.s32.totalorder %s28, 0
      %p133 = por %p131, %p132
      %p134 = scmp.ne.s32.totalorder %s122, %s123
      %p135 = scmp.eq.s32.totalorder %s29, 1
      %p136 = por %p134, %p135
      %p138 = scmp.ne.s32.totalorder %s123, %s137
      %p139 = scmp.eq.s32.totalorder %s29, 0
      %p140 = por %p138, %p139
      %s141 = ssub.s32 %s23, %s30
      %p142 = scmp.eq.s32.totalorder %s141, 0
      %s144 = sadd.s32 %s143, 1
      %s145 = scalar_select %p142, %s143, %s144
      %p148 = pneg %p142
      %p149 = scmp.eq.s32.totalorder %s23, 1
      %p150 = por %p148, %p149
      %p151 = scmp.ne.s32.totalorder %s143, %s146
      %p152 = scmp.eq.s32.totalorder %s23, 0
      %p153 = por %p151, %p152
      %p154 = scmp.ne.s32.totalorder %s143, %s146
      %p155 = scmp.eq.s32.totalorder %s28, 1
      %p156 = por %p154, %p155
      %p157 = scmp.ne.s32.totalorder %s146, %s147
      %p158 = scmp.eq.s32.totalorder %s28, 0
      %p159 = por %p157, %p158
      %p160 = scmp.ne.s32.totalorder %s146, %s147
      %p161 = scmp.eq.s32.totalorder %s29, 1
      %p162 = por %p160, %p161
      %p164 = scmp.ne.s32.totalorder %s147, %s163
      %p165 = scmp.eq.s32.totalorder %s29, 0
      %p166 = por %p164, %p165
      %s167 = ssub.s32 %s23, %s30
      %p168 = scmp.eq.s32.totalorder %s167, 0
      %s170 = sadd.s32 %s169, 1
      %s171 = scalar_select %p168, %s169, %s170
      %p174 = pneg %p168
      %p175 = scmp.eq.s32.totalorder %s23, 1
      %p176 = por %p174, %p175
      %p177 = scmp.ne.s32.totalorder %s169, %s172
      %p178 = scmp.eq.s32.totalorder %s23, 0
      %p179 = por %p177, %p178
      %p180 = scmp.ne.s32.totalorder %s169, %s172
      %p181 = scmp.eq.s32.totalorder %s28, 1
      %p182 = por %p180, %p181
      %p183 = scmp.ne.s32.totalorder %s172, %s173
      %p184 = scmp.eq.s32.totalorder %s28, 0
      %p185 = por %p183, %p184
      %p186 = scmp.ne.s32.totalorder %s172, %s173
      %p187 = scmp.eq.s32.totalorder %s29, 1
      %p188 = por %p186, %p187
      %p190 = scmp.ne.s32.totalorder %s173, %s189
      %p191 = scmp.eq.s32.totalorder %s29, 0
      %p192 = por %p190, %p191
      %p193 = scmp.le.s32.totalorder 1, %s23
      %p194 = scmp.lt.s32.totalorder %s23, 3
      %p195 = pnand %p193, %p194
      %p196 = pneg %p195
      // Predicated region
      $region9: #{tpu_custom_call.1} parent=5 // pred_check
        _
      $region10: #{tpu_custom_call.1} parent=5 // pred_check_branch
        %198 = sbr.rel (%p195) target = $region12
      $region11: #{tpu_custom_call.1} parent=5 // pred_region
        %s199 = ssub.s32 %s23, 1
        // Predicated region
        $region13: #{tpu_custom_call.1} parent=11 // pred_check
          %p200 = pneg %p44
        $region14: #{tpu_custom_call.1} parent=11 // pred_check_branch
          %202 = sbr.rel (%p200) target = $region16
        $region15: #{tpu_custom_call.1} parent=11 // pred_region
          %204 = vsyncadd [#allocation8], 0
          %s205 = sshll.u32 %s0, 4
          %s206 = int_to_ptr.hbm [resolvable:$true] %s205
          %s207 = sshll.u32 [#allocation7], 4
          %s208 = int_to_ptr.vmem [resolvable:$true] %s207
          %213 = dma.hbm_to_vmem [thread:$0]  %s206, 512, %s208, [#allocation8], 128, 128, 8
        $region16: #{tpu_custom_call.1} parent=11 // pred_fallthru
          _
        // Predicated region
        $region17: #{tpu_custom_call.1} parent=11 // pred_check
          %p214 = pneg %p91
        $region18: #{tpu_custom_call.1} parent=11 // pred_check_branch
          %216 = sbr.rel (%p214) target = $region20
        $region19: #{tpu_custom_call.1} parent=11 // pred_region
          %218 = vsyncadd [#allocation11], 0
          %s219 = sshll.u32 %s2, 4
          %s220 = int_to_ptr.hbm [resolvable:$true] %s219
          %s221 = sshll.u32 [#allocation12], 4
          %s222 = int_to_ptr.vmem [resolvable:$true] %s221
          %227 = dma.hbm_to_vmem [thread:$0]  %s220, 512, %s222, [#allocation11], 128, 128, 8
        $region20: #{tpu_custom_call.1} parent=11 // pred_fallthru
          _
        // Predicated region
        $region21: #{tpu_custom_call.1} parent=11 // pred_check
          %p228 = pneg %p112
        $region22: #{tpu_custom_call.1} parent=11 // pred_check_branch
          %230 = sbr.rel (%p228) target = $region24
        $region23: #{tpu_custom_call.1} parent=11 // pred_region
          %232 = vsyncadd [#allocation14], 0
          %s233 = sshll.u32 %s3, 4
          %s234 = int_to_ptr.hbm [resolvable:$true] %s233
          %s235 = sshll.u32 [#allocation13], 4
          %s236 = int_to_ptr.vmem [resolvable:$true] %s235
          %241 = dma.hbm_to_vmem [thread:$0]  %s234, 512, %s236, [#allocation14], 128, 128, 8
        $region24: #{tpu_custom_call.1} parent=11 // pred_fallthru
          _
        // Predicated region
        $region25: #{tpu_custom_call.1} parent=11 // pred_check
          %p242 = pneg %p133
        $region26: #{tpu_custom_call.1} parent=11 // pred_check_branch
          %244 = sbr.rel (%p242) target = $region28
        $region27: #{tpu_custom_call.1} parent=11 // pred_region
          %246 = vsyncadd [#allocation14], 0
          %s247 = sshll.u32 %s4, 4
          %s248 = int_to_ptr.hbm [resolvable:$true] %s247
          %s249 = sshll.u32 [#allocation15], 4
          %s250 = int_to_ptr.vmem [resolvable:$true] %s249
          %255 = dma.hbm_to_vmem [thread:$0]  %s248, 256, %s250, [#allocation14], 128, 128, 8
        $region28: #{tpu_custom_call.1} parent=11 // pred_fallthru
          _
      $region12: #{tpu_custom_call.1} parent=5 // pred_fallthru
        _
      %p256 = scmp.lt.s32.totalorder %s23, 2
      // Predicated region
      $region29: #{tpu_custom_call.1} parent=5 // pred_check
        %p257 = pneg %p256
      $region30: #{tpu_custom_call.1} parent=5 // pred_check_branch
        %259 = sbr.rel (%p257) target = $region32
      $region31: #{tpu_custom_call.1} parent=5 // pred_region
        // Predicated region
        $region33: #{tpu_custom_call.1} parent=31 // pred_check
          %p260 = pneg %p64
        $region34: #{tpu_custom_call.1} parent=31 // pred_check_branch
          %262 = sbr.rel (%p260) target = $region36
        $region35: #{tpu_custom_call.1} parent=31 // pred_region
          %s263 = sand.u32 %s23, 1
          %s264 = scalar_lea.sflag [#allocation11], %s263
          %s265 = sand.u32 %s54, 1
          %s266 = smul.addr %s265, 768
          %s267 = scalar_lea.vmem [#allocation10], %s266
          %s268 = smul.u32 12, %s23
          %270 = vsyncadd %s264, 0
          %s271 = smul.addr %s268, 4
          %s272 = scalar_lea.hbm %s1, %s271
          %s273 = sshll.u32 %s272, 4
          %s274 = int_to_ptr.hbm [resolvable:$true] %s273
          %s275 = sshll.u32 %s267, 4
          %s276 = int_to_ptr.vmem [resolvable:$true] %s275
          %281 = dma.hbm_to_vmem [thread:$0]  %s274, 12288, %s276, %s264, 1536, 768, 48
        $region36: #{tpu_custom_call.1} parent=31 // pred_fallthru
          _
        // Predicated region
        $region37: #{tpu_custom_call.1} parent=31 // pred_check
          %p282 = pneg %p153
        $region38: #{tpu_custom_call.1} parent=31 // pred_check_branch
          %284 = sbr.rel (%p282) target = $region40
        $region39: #{tpu_custom_call.1} parent=31 // pred_region
          %s285 = sand.u32 %s143, 1
          %s286 = scalar_lea.sflag [#allocation17], %s285
          %s287 = sand.u32 %s143, 1
          %s288 = smul.addr %s287, 256
          %s289 = scalar_lea.vmem [#allocation16], %s288
          %s290 = smul.u32 64, %s23
          %292 = vsyncadd %s286, 0
          %s293 = smul.addr %s290, 4
          %s294 = scalar_lea.hbm %s5, %s293
          %s295 = sshll.u32 %s294, 4
          %s296 = int_to_ptr.hbm [resolvable:$true] %s295
          %s297 = sshll.u32 %s289, 4
          %s298 = int_to_ptr.vmem [resolvable:$true] %s297
          %303 = dma.hbm_to_vmem [thread:$0]  %s296, 4096, %s298, %s286, 64, 64, 4
        $region40: #{tpu_custom_call.1} parent=31 // pred_fallthru
          _
      $region32: #{tpu_custom_call.1} parent=5 // pred_fallthru
        _
      %p304 = scmp.le.s32.totalorder 1, %s23
      %p305 = scmp.lt.s32.totalorder %s23, 3
      %p306 = pnand %p304, %p305
      %p307 = pneg %p306
      // Predicated region
      $region41: #{tpu_custom_call.1} parent=5 // pred_check
        _
      $region42: #{tpu_custom_call.1} parent=5 // pred_check_branch
        %309 = sbr.rel (%p306) target = $region44
      $region43: #{tpu_custom_call.1} parent=5 // pred_region
        %s310 = ssub.s32 %s23, 1
        // Predicated region
        $region45: #{tpu_custom_call.1} parent=43 // pred_check
          %p311 = pneg %p44
        $region46: #{tpu_custom_call.1} parent=43 // pred_check_branch
          %313 = sbr.rel (%p311) target = $region48
        $region47: #{tpu_custom_call.1} parent=43 // pred_region
          %315 = dma.done [#allocation8], 512
        $region48: #{tpu_custom_call.1} parent=43 // pred_fallthru
          _
        %s316 = sand.u32 %s28, 1
        %s317 = scalar_lea.sflag [#allocation11], %s316
        %s318 = sand.u32 %s57, 1
        %s319 = smul.addr %s318, 768
        %s320 = scalar_lea.vmem [#allocation10], %s319
        // Predicated region
        $region49: #{tpu_custom_call.1} parent=43 // pred_check
          %p321 = pneg %p70
        $region50: #{tpu_custom_call.1} parent=43 // pred_check_branch
          %323 = sbr.rel (%p321) target = $region52
        $region51: #{tpu_custom_call.1} parent=43 // pred_region
          %325 = dma.done %s317, 12288
        $region52: #{tpu_custom_call.1} parent=43 // pred_fallthru
          _
        // Predicated region
        $region53: #{tpu_custom_call.1} parent=43 // pred_check
          %p326 = pneg %p91
        $region54: #{tpu_custom_call.1} parent=43 // pred_check_branch
          %328 = sbr.rel (%p326) target = $region56
        $region55: #{tpu_custom_call.1} parent=43 // pred_region
          %330 = dma.done [#allocation11], 512
        $region56: #{tpu_custom_call.1} parent=43 // pred_fallthru
          _
        // Predicated region
        $region57: #{tpu_custom_call.1} parent=43 // pred_check
          %p331 = pneg %p112
        $region58: #{tpu_custom_call.1} parent=43 // pred_check_branch
          %333 = sbr.rel (%p331) target = $region60
        $region59: #{tpu_custom_call.1} parent=43 // pred_region
          %335 = dma.done [#allocation14], 512
        $region60: #{tpu_custom_call.1} parent=43 // pred_fallthru
          _
        // Predicated region
        $region61: #{tpu_custom_call.1} parent=43 // pred_check
          %p336 = pneg %p133
        $region62: #{tpu_custom_call.1} parent=43 // pred_check_branch
          %338 = sbr.rel (%p336) target = $region64
        $region63: #{tpu_custom_call.1} parent=43 // pred_region
          %340 = dma.done [#allocation14], 256
        $region64: #{tpu_custom_call.1} parent=43 // pred_fallthru
          _
        %s341 = sand.u32 %s146, 1
        %s342 = scalar_lea.sflag [#allocation17], %s341
        %s343 = sand.u32 %s146, 1
        %s344 = smul.addr %s343, 256
        %s345 = scalar_lea.vmem [#allocation16], %s344
        // Predicated region
        $region65: #{tpu_custom_call.1} parent=43 // pred_check
          %p346 = pneg %p159
        $region66: #{tpu_custom_call.1} parent=43 // pred_check_branch
          %348 = sbr.rel (%p346) target = $region68
        $region67: #{tpu_custom_call.1} parent=43 // pred_region
          %350 = dma.done %s342, 4096
        $region68: #{tpu_custom_call.1} parent=43 // pred_fallthru
          _
        %p351 = pneg %p44
        %p352 = pneg %p41
        %s353 = sand.u32 %s28, 1
        %s354 = scalar_lea.sflag [#allocation11], %s353
        %s355 = sand.u32 %s57, 1
        %s356 = smul.addr %s355, 768
        %s357 = scalar_lea.vmem [#allocation10], %s356
        %p358 = pneg %p70
        %p359 = pneg %p67
        %p360 = pneg %p91
        %p361 = pneg %p88
        %p362 = pneg %p112
        %p363 = pneg %p109
        %p364 = pneg %p133
        %p365 = pneg %p130
        %s366 = sand.u32 %s146, 1
        %s367 = scalar_lea.sflag [#allocation17], %s366
        %s368 = sand.u32 %s146, 1
        %s369 = smul.addr %s368, 256
        %s370 = scalar_lea.vmem [#allocation16], %s369
        %p371 = pneg %p159
        %p372 = pneg %p156
        %p373 = pneg %p185
        %p374 = pneg %p182
        %s375 = sand.u32 %s172, 1
        %s376 = scalar_lea.sflag [#allocation9], %s375
        %s377 = sand.u32 %s172, 1
        %s378 = smul.addr %s377, 32
        %s379 = scalar_lea.vmem [#allocation18], %s378
        %s380 = smul.u32 12, %s28
        %s381 = smul.u32 64, %s28
        %v383 = vld [vmem:[#allocation7] sm:$0xff]
        %v384 = vld [vmem:[#allocation7 + $0x8] sm:$0xff]
        %v385 = vld [vmem:[#allocation7 + $0x10] sm:$0xff]
        %v386 = vld [vmem:[#allocation7 + $0x18] sm:$0xff]
        %v387 = vpack.c.bf16 %v384, %v383
        %v388 = vpack.c.bf16 %v386, %v385
        %v389 = vld [vmem:[%s320] sm:$0xff]
        %v390 = vld [vmem:[%s320 + $0x8] sm:$0xff]
        %v391 = vld [vmem:[%s320 + $0x10] sm:$0xff]
        %v392 = vld [vmem:[%s320 + $0x18] sm:$0xff]
        %v393 = vld [vmem:[%s320 + $0x20] sm:$0xff]
        %v394 = vld [vmem:[%s320 + $0x28] sm:$0xff]
        %v395 = vld [vmem:[%s320 + $0x30] sm:$0xff]
        %v396 = vld [vmem:[%s320 + $0x38] sm:$0xff]
        %v397 = vld [vmem:[%s320 + $0x40] sm:$0xff]
        %v398 = vld [vmem:[%s320 + $0x48] sm:$0xff]
        %v399 = vld [vmem:[%s320 + $0x50] sm:$0xff]
        %v400 = vld [vmem:[%s320 + $0x58] sm:$0xff]
        %v401 = vld [vmem:[%s320 + $0x60] sm:$0xff]
        %v402 = vld [vmem:[%s320 + $0x68] sm:$0xff]
        %v403 = vld [vmem:[%s320 + $0x70] sm:$0xff]
        %v404 = vld [vmem:[%s320 + $0x78] sm:$0xff]
        %v405 = vld [vmem:[%s320 + $0x80] sm:$0xff]
        %v406 = vld [vmem:[%s320 + $0x88] sm:$0xff]
        %v407 = vld [vmem:[%s320 + $0x90] sm:$0xff]
        %v408 = vld [vmem:[%s320 + $0x98] sm:$0xff]
        %v409 = vld [vmem:[%s320 + $0xa0] sm:$0xff]
        %v410 = vld [vmem:[%s320 + $0xa8] sm:$0xff]
        %v411 = vld [vmem:[%s320 + $0xb0] sm:$0xff]
        %v412 = vld [vmem:[%s320 + $0xb8] sm:$0xff]
        %v413 = vld [vmem:[%s320 + $0xc0] sm:$0xff]
        %v414 = vld [vmem:[%s320 + $0xc8] sm:$0xff]
        %v415 = vld [vmem:[%s320 + $0xd0] sm:$0xff]
        %v416 = vld [vmem:[%s320 + $0xd8] sm:$0xff]
        %v417 = vld [vmem:[%s320 + $0xe0] sm:$0xff]
        %v418 = vld [vmem:[%s320 + $0xe8] sm:$0xff]
        %v419 = vld [vmem:[%s320 + $0xf0] sm:$0xff]
        %v420 = vld [vmem:[%s320 + $0xf8] sm:$0xff]
        %v421 = vld [vmem:[%s320 + $0x100] sm:$0xff]
        %v422 = vld [vmem:[%s320 + $0x108] sm:$0xff]
        %v423 = vld [vmem:[%s320 + $0x110] sm:$0xff]
        %v424 = vld [vmem:[%s320 + $0x118] sm:$0xff]
        %v425 = vld [vmem:[%s320 + $0x120] sm:$0xff]
        %v426 = vld [vmem:[%s320 + $0x128] sm:$0xff]
        %v427 = vld [vmem:[%s320 + $0x130] sm:$0xff]
        %v428 = vld [vmem:[%s320 + $0x138] sm:$0xff]
        %v429 = vld [vmem:[%s320 + $0x140] sm:$0xff]
        %v430 = vld [vmem:[%s320 + $0x148] sm:$0xff]
        %v431 = vld [vmem:[%s320 + $0x150] sm:$0xff]
        %v432 = vld [vmem:[%s320 + $0x158] sm:$0xff]
        %v433 = vld [vmem:[%s320 + $0x160] sm:$0xff]
        %v434 = vld [vmem:[%s320 + $0x168] sm:$0xff]
        %v435 = vld [vmem:[%s320 + $0x170] sm:$0xff]
        %v436 = vld [vmem:[%s320 + $0x178] sm:$0xff]
        %v437 = vld [vmem:[%s320 + $0x180] sm:$0xff]
        %v438 = vld [vmem:[%s320 + $0x188] sm:$0xff]
        %v439 = vld [vmem:[%s320 + $0x190] sm:$0xff]
        %v440 = vld [vmem:[%s320 + $0x198] sm:$0xff]
        %v441 = vld [vmem:[%s320 + $0x1a0] sm:$0xff]
        %v442 = vld [vmem:[%s320 + $0x1a8] sm:$0xff]
        %v443 = vld [vmem:[%s320 + $0x1b0] sm:$0xff]
        %v444 = vld [vmem:[%s320 + $0x1b8] sm:$0xff]
        %v445 = vld [vmem:[%s320 + $0x1c0] sm:$0xff]
        %v446 = vld [vmem:[%s320 + $0x1c8] sm:$0xff]
        %v447 = vld [vmem:[%s320 + $0x1d0] sm:$0xff]
        %v448 = vld [vmem:[%s320 + $0x1d8] sm:$0xff]
        %v449 = vld [vmem:[%s320 + $0x1e0] sm:$0xff]
        %v450 = vld [vmem:[%s320 + $0x1e8] sm:$0xff]
        %v451 = vld [vmem:[%s320 + $0x1f0] sm:$0xff]
        %v452 = vld [vmem:[%s320 + $0x1f8] sm:$0xff]
        %v453 = vld [vmem:[%s320 + $0x200] sm:$0xff]
        %v454 = vld [vmem:[%s320 + $0x208] sm:$0xff]
        %v455 = vld [vmem:[%s320 + $0x210] sm:$0xff]
        %v456 = vld [vmem:[%s320 + $0x218] sm:$0xff]
        %v457 = vld [vmem:[%s320 + $0x220] sm:$0xff]
        %v458 = vld [vmem:[%s320 + $0x228] sm:$0xff]
        %v459 = vld [vmem:[%s320 + $0x230] sm:$0xff]
        %v460 = vld [vmem:[%s320 + $0x238] sm:$0xff]
        %v461 = vld [vmem:[%s320 + $0x240] sm:$0xff]
        %v462 = vld [vmem:[%s320 + $0x248] sm:$0xff]
        %v463 = vld [vmem:[%s320 + $0x250] sm:$0xff]
        %v464 = vld [vmem:[%s320 + $0x258] sm:$0xff]
        %v465 = vld [vmem:[%s320 + $0x260] sm:$0xff]
        %v466 = vld [vmem:[%s320 + $0x268] sm:$0xff]
        %v467 = vld [vmem:[%s320 + $0x270] sm:$0xff]
        %v468 = vld [vmem:[%s320 + $0x278] sm:$0xff]
        %v469 = vld [vmem:[%s320 + $0x280] sm:$0xff]
        %v470 = vld [vmem:[%s320 + $0x288] sm:$0xff]
        %v471 = vld [vmem:[%s320 + $0x290] sm:$0xff]
        %v472 = vld [vmem:[%s320 + $0x298] sm:$0xff]
        %v473 = vld [vmem:[%s320 + $0x2a0] sm:$0xff]
        %v474 = vld [vmem:[%s320 + $0x2a8] sm:$0xff]
        %v475 = vld [vmem:[%s320 + $0x2b0] sm:$0xff]
        %v476 = vld [vmem:[%s320 + $0x2b8] sm:$0xff]
        %v477 = vld [vmem:[%s320 + $0x2c0] sm:$0xff]
        %v478 = vld [vmem:[%s320 + $0x2c8] sm:$0xff]
        %v479 = vld [vmem:[%s320 + $0x2d0] sm:$0xff]
        %v480 = vld [vmem:[%s320 + $0x2d8] sm:$0xff]
        %v481 = vld [vmem:[%s320 + $0x2e0] sm:$0xff]
        %v482 = vld [vmem:[%s320 + $0x2e8] sm:$0xff]
        %v483 = vld [vmem:[%s320 + $0x2f0] sm:$0xff]
        %v484 = vld [vmem:[%s320 + $0x2f8] sm:$0xff]
        %v581 = vunpack.c.l.b16 %v389
        %v582 = vunpack.c.h.b16 %v389
        %v583 = vunpack.c.l.b16 %v390
        %v584 = vunpack.c.h.b16 %v390
        %v585 = vunpack.c.l.b16 %v391
        %v586 = vunpack.c.h.b16 %v391
        %v587 = vunpack.c.l.b16 %v392
        %v588 = vunpack.c.h.b16 %v392
        %v589 = vunpack.c.l.b16 %v393
        %v590 = vunpack.c.h.b16 %v393
        %v591 = vunpack.c.l.b16 %v394
        %v592 = vunpack.c.h.b16 %v394
        %v593 = vunpack.c.l.b16 %v395
        %v594 = vunpack.c.h.b16 %v395
        %v595 = vunpack.c.l.b16 %v396
        %v596 = vunpack.c.h.b16 %v396
        %v597 = vunpack.c.l.b16 %v397
        %v598 = vunpack.c.h.b16 %v397
        %v599 = vunpack.c.l.b16 %v398
        %v600 = vunpack.c.h.b16 %v398
        %v601 = vunpack.c.l.b16 %v399
        %v602 = vunpack.c.h.b16 %v399
        %v603 = vunpack.c.l.b16 %v400
        %v604 = vunpack.c.h.b16 %v400
        %v605 = vunpack.c.l.b16 %v401
        %v606 = vunpack.c.h.b16 %v401
        %v607 = vunpack.c.l.b16 %v402
        %v608 = vunpack.c.h.b16 %v402
        %v609 = vunpack.c.l.b16 %v403
        %v610 = vunpack.c.h.b16 %v403
        %v611 = vunpack.c.l.b16 %v404
        %v612 = vunpack.c.h.b16 %v404
        %v613 = vunpack.c.l.b16 %v405
        %v614 = vunpack.c.h.b16 %v405
        %v615 = vunpack.c.l.b16 %v406
        %v616 = vunpack.c.h.b16 %v406
        %v617 = vunpack.c.l.b16 %v407
        %v618 = vunpack.c.h.b16 %v407
        %v619 = vunpack.c.l.b16 %v408
        %v620 = vunpack.c.h.b16 %v408
        %v621 = vunpack.c.l.b16 %v409
        %v622 = vunpack.c.h.b16 %v409
        %v623 = vunpack.c.l.b16 %v410
        %v624 = vunpack.c.h.b16 %v410
        %v625 = vunpack.c.l.b16 %v411
        %v626 = vunpack.c.h.b16 %v411
        %v627 = vunpack.c.l.b16 %v412
        %v628 = vunpack.c.h.b16 %v412
        %v629 = vunpack.c.l.b16 %v413
        %v630 = vunpack.c.h.b16 %v413
        %v631 = vunpack.c.l.b16 %v414
        %v632 = vunpack.c.h.b16 %v414
        %v633 = vunpack.c.l.b16 %v415
        %v634 = vunpack.c.h.b16 %v415
        %v635 = vunpack.c.l.b16 %v416
        %v636 = vunpack.c.h.b16 %v416
        %v637 = vunpack.c.l.b16 %v417
        %v638 = vunpack.c.h.b16 %v417
        %v639 = vunpack.c.l.b16 %v418
        %v640 = vunpack.c.h.b16 %v418
        %v641 = vunpack.c.l.b16 %v419
        %v642 = vunpack.c.h.b16 %v419
        %v643 = vunpack.c.l.b16 %v420
        %v644 = vunpack.c.h.b16 %v420
        %v645 = vunpack.c.l.b16 %v421
        %v646 = vunpack.c.h.b16 %v421
        %v647 = vunpack.c.l.b16 %v422
        %v648 = vunpack.c.h.b16 %v422
        %v649 = vunpack.c.l.b16 %v423
        %v650 = vunpack.c.h.b16 %v423
        %v651 = vunpack.c.l.b16 %v424
        %v652 = vunpack.c.h.b16 %v424
        %v653 = vunpack.c.l.b16 %v425
        %v654 = vunpack.c.h.b16 %v425
        %v655 = vunpack.c.l.b16 %v426
        %v656 = vunpack.c.h.b16 %v426
        %v657 = vunpack.c.l.b16 %v427
        %v658 = vunpack.c.h.b16 %v427
        %v659 = vunpack.c.l.b16 %v428
        %v660 = vunpack.c.h.b16 %v428
        %v661 = vunpack.c.l.b16 %v429
        %v662 = vunpack.c.h.b16 %v429
        %v663 = vunpack.c.l.b16 %v430
        %v664 = vunpack.c.h.b16 %v430
        %v665 = vunpack.c.l.b16 %v431
        %v666 = vunpack.c.h.b16 %v431
        %v667 = vunpack.c.l.b16 %v432
        %v668 = vunpack.c.h.b16 %v432
        %v669 = vunpack.c.l.b16 %v433
        %v670 = vunpack.c.h.b16 %v433
        %v671 = vunpack.c.l.b16 %v434
        %v672 = vunpack.c.h.b16 %v434
        %v673 = vunpack.c.l.b16 %v435
        %v674 = vunpack.c.h.b16 %v435
        %v675 = vunpack.c.l.b16 %v436
        %v676 = vunpack.c.h.b16 %v436
        %v677 = vunpack.c.l.b16 %v437
        %v678 = vunpack.c.h.b16 %v437
        %v679 = vunpack.c.l.b16 %v438
        %v680 = vunpack.c.h.b16 %v438
        %v681 = vunpack.c.l.b16 %v439
        %v682 = vunpack.c.h.b16 %v439
        %v683 = vunpack.c.l.b16 %v440
        %v684 = vunpack.c.h.b16 %v440
        %v685 = vunpack.c.l.b16 %v441
        %v686 = vunpack.c.h.b16 %v441
        %v687 = vunpack.c.l.b16 %v442
        %v688 = vunpack.c.h.b16 %v442
        %v689 = vunpack.c.l.b16 %v443
        %v690 = vunpack.c.h.b16 %v443
        %v691 = vunpack.c.l.b16 %v444
        %v692 = vunpack.c.h.b16 %v444
        %v693 = vunpack.c.l.b16 %v445
        %v694 = vunpack.c.h.b16 %v445
        %v695 = vunpack.c.l.b16 %v446
        %v696 = vunpack.c.h.b16 %v446
        %v697 = vunpack.c.l.b16 %v447
        %v698 = vunpack.c.h.b16 %v447
        %v699 = vunpack.c.l.b16 %v448
        %v700 = vunpack.c.h.b16 %v448
        %v701 = vunpack.c.l.b16 %v449
        %v702 = vunpack.c.h.b16 %v449
        %v703 = vunpack.c.l.b16 %v450
        %v704 = vunpack.c.h.b16 %v450
        %v705 = vunpack.c.l.b16 %v451
        %v706 = vunpack.c.h.b16 %v451
        %v707 = vunpack.c.l.b16 %v452
        %v708 = vunpack.c.h.b16 %v452
        %v709 = vunpack.c.l.b16 %v453
        %v710 = vunpack.c.h.b16 %v453
        %v711 = vunpack.c.l.b16 %v454
        %v712 = vunpack.c.h.b16 %v454
        %v713 = vunpack.c.l.b16 %v455
        %v714 = vunpack.c.h.b16 %v455
        %v715 = vunpack.c.l.b16 %v456
        %v716 = vunpack.c.h.b16 %v456
        %v717 = vunpack.c.l.b16 %v457
        %v718 = vunpack.c.h.b16 %v457
        %v719 = vunpack.c.l.b16 %v458
        %v720 = vunpack.c.h.b16 %v458
        %v721 = vunpack.c.l.b16 %v459
        %v722 = vunpack.c.h.b16 %v459
        %v723 = vunpack.c.l.b16 %v460
        %v724 = vunpack.c.h.b16 %v460
        %v725 = vunpack.c.l.b16 %v461
        %v726 = vunpack.c.h.b16 %v461
        %v727 = vunpack.c.l.b16 %v462
        %v728 = vunpack.c.h.b16 %v462
        %v729 = vunpack.c.l.b16 %v463
        %v730 = vunpack.c.h.b16 %v463
        %v731 = vunpack.c.l.b16 %v464
        %v732 = vunpack.c.h.b16 %v464
        %v733 = vunpack.c.l.b16 %v465
        %v734 = vunpack.c.h.b16 %v465
        %v735 = vunpack.c.l.b16 %v466
        %v736 = vunpack.c.h.b16 %v466
        %v737 = vunpack.c.l.b16 %v467
        %v738 = vunpack.c.h.b16 %v467
        %v739 = vunpack.c.l.b16 %v468
        %v740 = vunpack.c.h.b16 %v468
        %v741 = vunpack.c.l.b16 %v469
        %v742 = vunpack.c.h.b16 %v469
        %v743 = vunpack.c.l.b16 %v470
        %v744 = vunpack.c.h.b16 %v470
        %v745 = vunpack.c.l.b16 %v471
        %v746 = vunpack.c.h.b16 %v471
        %v747 = vunpack.c.l.b16 %v472
        %v748 = vunpack.c.h.b16 %v472
        %v749 = vunpack.c.l.b16 %v473
        %v750 = vunpack.c.h.b16 %v473
        %v751 = vunpack.c.l.b16 %v474
        %v752 = vunpack.c.h.b16 %v474
        %v753 = vunpack.c.l.b16 %v475
        %v754 = vunpack.c.h.b16 %v475
        %v755 = vunpack.c.l.b16 %v476
        %v756 = vunpack.c.h.b16 %v476
        %v757 = vunpack.c.l.b16 %v477
        %v758 = vunpack.c.h.b16 %v477
        %v759 = vunpack.c.l.b16 %v478
        %v760 = vunpack.c.h.b16 %v478
        %v761 = vunpack.c.l.b16 %v479
        %v762 = vunpack.c.h.b16 %v479
        %v763 = vunpack.c.l.b16 %v480
        %v764 = vunpack.c.h.b16 %v480
        %v765 = vunpack.c.l.b16 %v481
        %v766 = vunpack.c.h.b16 %v481
        %v767 = vunpack.c.l.b16 %v482
        %v768 = vunpack.c.h.b16 %v482
        %v769 = vunpack.c.l.b16 %v483
        %v770 = vunpack.c.h.b16 %v483
        %v771 = vunpack.c.l.b16 %v484
        %v772 = vunpack.c.h.b16 %v484
        %v773 = vpack.c.b16 %v593, %v581
        %v774 = vpack.c.b16 %v594, %v582
        %v775 = vpack.c.b16 %v595, %v583
        %v776 = vpack.c.b16 %v596, %v584
        %v777 = vpack.c.b16 %v597, %v585
        %v778 = vpack.c.b16 %v598, %v586
        %v779 = vpack.c.b16 %v599, %v587
        %v780 = vpack.c.b16 %v600, %v588
        %v781 = vpack.c.b16 %v601, %v589
        %v782 = vpack.c.b16 %v602, %v590
        %v783 = vpack.c.b16 %v603, %v591
        %v784 = vpack.c.b16 %v604, %v592
        %v785 = vpack.c.b16 %v617, %v605
        %v786 = vpack.c.b16 %v618, %v606
        %v787 = vpack.c.b16 %v619, %v607
        %v788 = vpack.c.b16 %v620, %v608
        %v789 = vpack.c.b16 %v621, %v609
        %v790 = vpack.c.b16 %v622, %v610
        %v791 = vpack.c.b16 %v623, %v611
        %v792 = vpack.c.b16 %v624, %v612
        %v793 = vpack.c.b16 %v625, %v613
        %v794 = vpack.c.b16 %v626, %v614
        %v795 = vpack.c.b16 %v627, %v615
        %v796 = vpack.c.b16 %v628, %v616
        %v797 = vpack.c.b16 %v641, %v629
        %v798 = vpack.c.b16 %v642, %v630
        %v799 = vpack.c.b16 %v643, %v631
        %v800 = vpack.c.b16 %v644, %v632
        %v801 = vpack.c.b16 %v645, %v633
        %v802 = vpack.c.b16 %v646, %v634
        %v803 = vpack.c.b16 %v647, %v635
        %v804 = vpack.c.b16 %v648, %v636
        %v805 = vpack.c.b16 %v649, %v637
        %v806 = vpack.c.b16 %v650, %v638
        %v807 = vpack.c.b16 %v651, %v639
        %v808 = vpack.c.b16 %v652, %v640
        %v809 = vpack.c.b16 %v665, %v653
        %v810 = vpack.c.b16 %v666, %v654
        %v811 = vpack.c.b16 %v667, %v655
        %v812 = vpack.c.b16 %v668, %v656
        %v813 = vpack.c.b16 %v669, %v657
        %v814 = vpack.c.b16 %v670, %v658
        %v815 = vpack.c.b16 %v671, %v659
        %v816 = vpack.c.b16 %v672, %v660
        %v817 = vpack.c.b16 %v673, %v661
        %v818 = vpack.c.b16 %v674, %v662
        %v819 = vpack.c.b16 %v675, %v663
        %v820 = vpack.c.b16 %v676, %v664
        %v821 = vpack.c.b16 %v689, %v677
        %v822 = vpack.c.b16 %v690, %v678
        %v823 = vpack.c.b16 %v691, %v679
        %v824 = vpack.c.b16 %v692, %v680
        %v825 = vpack.c.b16 %v693, %v681
        %v826 = vpack.c.b16 %v694, %v682
        %v827 = vpack.c.b16 %v695, %v683
        %v828 = vpack.c.b16 %v696, %v684
        %v829 = vpack.c.b16 %v697, %v685
        %v830 = vpack.c.b16 %v698, %v686
        %v831 = vpack.c.b16 %v699, %v687
        %v832 = vpack.c.b16 %v700, %v688
        %v833 = vpack.c.b16 %v713, %v701
        %v834 = vpack.c.b16 %v714, %v702
        %v835 = vpack.c.b16 %v715, %v703
        %v836 = vpack.c.b16 %v716, %v704
        %v837 = vpack.c.b16 %v717, %v705
        %v838 = vpack.c.b16 %v718, %v706
        %v839 = vpack.c.b16 %v719, %v707
        %v840 = vpack.c.b16 %v720, %v708
        %v841 = vpack.c.b16 %v721, %v709
        %v842 = vpack.c.b16 %v722, %v710
        %v843 = vpack.c.b16 %v723, %v711
        %v844 = vpack.c.b16 %v724, %v712
        %v845 = vpack.c.b16 %v737, %v725
        %v846 = vpack.c.b16 %v738, %v726
        %v847 = vpack.c.b16 %v739, %v727
        %v848 = vpack.c.b16 %v740, %v728
        %v849 = vpack.c.b16 %v741, %v729
        %v850 = vpack.c.b16 %v742, %v730
        %v851 = vpack.c.b16 %v743, %v731
        %v852 = vpack.c.b16 %v744, %v732
        %v853 = vpack.c.b16 %v745, %v733
        %v854 = vpack.c.b16 %v746, %v734
        %v855 = vpack.c.b16 %v747, %v735
        %v856 = vpack.c.b16 %v748, %v736
        %v857 = vpack.c.b16 %v761, %v749
        %v858 = vpack.c.b16 %v762, %v750
        %v859 = vpack.c.b16 %v763, %v751
        %v860 = vpack.c.b16 %v764, %v752
        %v861 = vpack.c.b16 %v765, %v753
        %v862 = vpack.c.b16 %v766, %v754
        %v863 = vpack.c.b16 %v767, %v755
        %v864 = vpack.c.b16 %v768, %v756
        %v865 = vpack.c.b16 %v769, %v757
        %v866 = vpack.c.b16 %v770, %v758
        %v867 = vpack.c.b16 %v771, %v759
        %v868 = vpack.c.b16 %v772, %v760
        %965 = vmatpush.bf16.msra.mxu0 %v857
        %966 = vmatpush.bf16.msra.mxu0 %v845
        %967 = vmatpush.bf16.msra.mxu0 %v833
        %968 = vmatpush.bf16.msra.mxu0 %v821
        %969 = vmatpush.bf16.msra.mxu0 %v809
        %970 = vmatpush.bf16.msra.mxu0 %v797
        %971 = vmatpush.bf16.msra.mxu0 %v785
        %972 = vmatpush.bf16.msra.mxu0 %v773
        %973 = vmatmul.bf16.gmra.mxu0 %v387
        %v974 = vpop.f32.mrf.mxu0
        %v975 = vadd.f32 0.0, %v974
        %v976 = vpop.f32.mrf.mxu0
        %v977 = vadd.f32 0.0, %v976
        %978 = vmatmul.bf16.gmra.mxu0 %v388
        %v979 = vpop.f32.mrf.mxu0
        %v980 = vadd.f32 0.0, %v979
        %v981 = vpop.f32.mrf.mxu0
        %v982 = vadd.f32 0.0, %v981
        %983 = vdwg.mxu0
        %984 = vmatpush.bf16.msra.mxu0 %v858
        %985 = vmatpush.bf16.msra.mxu0 %v846
        %986 = vmatpush.bf16.msra.mxu0 %v834
        %987 = vmatpush.bf16.msra.mxu0 %v822
        %988 = vmatpush.bf16.msra.mxu0 %v810
        %989 = vmatpush.bf16.msra.mxu0 %v798
        %990 = vmatpush.bf16.msra.mxu0 %v786
        %991 = vmatpush.bf16.msra.mxu0 %v774
        %992 = vmatmul.bf16.gmra.mxu0 %v387
        %v993 = vpop.f32.mrf.mxu0
        %v994 = vadd.f32 0.0, %v993
        %v995 = vpop.f32.mrf.mxu0
        %v996 = vadd.f32 0.0, %v995
        %997 = vmatmul.bf16.gmra.mxu0 %v388
        %v998 = vpop.f32.mrf.mxu0
        %v999 = vadd.f32 0.0, %v998
        %v1000 = vpop.f32.mrf.mxu0
        %v1001 = vadd.f32 0.0, %v1000
        %1002 = vdwg.mxu0
        %1003 = vmatpush.bf16.msra.mxu0 %v859
        %1004 = vmatpush.bf16.msra.mxu0 %v847
        %1005 = vmatpush.bf16.msra.mxu0 %v835
        %1006 = vmatpush.bf16.msra.mxu0 %v823
        %1007 = vmatpush.bf16.msra.mxu0 %v811
        %1008 = vmatpush.bf16.msra.mxu0 %v799
        %1009 = vmatpush.bf16.msra.mxu0 %v787
        %1010 = vmatpush.bf16.msra.mxu0 %v775
        %1011 = vmatmul.bf16.gmra.mxu0 %v387
        %v1012 = vpop.f32.mrf.mxu0
        %v1013 = vadd.f32 0.0, %v1012
        %v1014 = vpop.f32.mrf.mxu0
        %v1015 = vadd.f32 0.0, %v1014
        %1016 = vmatmul.bf16.gmra.mxu0 %v388
        %v1017 = vpop.f32.mrf.mxu0
        %v1018 = vadd.f32 0.0, %v1017
        %v1019 = vpop.f32.mrf.mxu0
        %v1020 = vadd.f32 0.0, %v1019
        %1021 = vdwg.mxu0
        %1022 = vmatpush.bf16.msra.mxu0 %v860
        %1023 = vmatpush.bf16.msra.mxu0 %v848
        %1024 = vmatpush.bf16.msra.mxu0 %v836
        %1025 = vmatpush.bf16.msra.mxu0 %v824
        %1026 = vmatpush.bf16.msra.mxu0 %v812
        %1027 = vmatpush.bf16.msra.mxu0 %v800
        %1028 = vmatpush.bf16.msra.mxu0 %v788
        %1029 = vmatpush.bf16.msra.mxu0 %v776
        %1030 = vmatmul.bf16.gmra.mxu0 %v387
        %v1031 = vpop.f32.mrf.mxu0
        %v1032 = vadd.f32 0.0, %v1031
        %v1033 = vpop.f32.mrf.mxu0
        %v1034 = vadd.f32 0.0, %v1033
        %1035 = vmatmul.bf16.gmra.mxu0 %v388
        %v1036 = vpop.f32.mrf.mxu0
        %v1037 = vadd.f32 0.0, %v1036
        %v1038 = vpop.f32.mrf.mxu0
        %v1039 = vadd.f32 0.0, %v1038
        %1040 = vdwg.mxu0
        %1041 = vmatpush.bf16.msra.mxu0 %v861
        %1042 = vmatpush.bf16.msra.mxu0 %v849
        %1043 = vmatpush.bf16.msra.mxu0 %v837
        %1044 = vmatpush.bf16.msra.mxu0 %v825
        %1045 = vmatpush.bf16.msra.mxu0 %v813
        %1046 = vmatpush.bf16.msra.mxu0 %v801
        %1047 = vmatpush.bf16.msra.mxu0 %v789
        %1048 = vmatpush.bf16.msra.mxu0 %v777
        %1049 = vmatmul.bf16.gmra.mxu0 %v387
        %v1050 = vpop.f32.mrf.mxu0
        %v1051 = vadd.f32 0.0, %v1050
        %v1052 = vpop.f32.mrf.mxu0
        %v1053 = vadd.f32 0.0, %v1052
        %1054 = vmatmul.bf16.gmra.mxu0 %v388
        %v1055 = vpop.f32.mrf.mxu0
        %v1056 = vadd.f32 0.0, %v1055
        %v1057 = vpop.f32.mrf.mxu0
        %v1058 = vadd.f32 0.0, %v1057
        %1059 = vdwg.mxu0
        %1060 = vmatpush.bf16.msra.mxu0 %v862
        %1061 = vmatpush.bf16.msra.mxu0 %v850
        %1062 = vmatpush.bf16.msra.mxu0 %v838
        %1063 = vmatpush.bf16.msra.mxu0 %v826
        %1064 = vmatpush.bf16.msra.mxu0 %v814
        %1065 = vmatpush.bf16.msra.mxu0 %v802
        %1066 = vmatpush.bf16.msra.mxu0 %v790
        %1067 = vmatpush.bf16.msra.mxu0 %v778
        %1068 = vmatmul.bf16.gmra.mxu0 %v387
        %v1069 = vpop.f32.mrf.mxu0
        %v1070 = vadd.f32 0.0, %v1069
        %v1071 = vpop.f32.mrf.mxu0
        %v1072 = vadd.f32 0.0, %v1071
        %1073 = vmatmul.bf16.gmra.mxu0 %v388
        %v1074 = vpop.f32.mrf.mxu0
        %v1075 = vadd.f32 0.0, %v1074
        %v1076 = vpop.f32.mrf.mxu0
        %v1077 = vadd.f32 0.0, %v1076
        %1078 = vdwg.mxu0
        %1079 = vmatpush.bf16.msra.mxu0 %v863
        %1080 = vmatpush.bf16.msra.mxu0 %v851
        %1081 = vmatpush.bf16.msra.mxu0 %v839
        %1082 = vmatpush.bf16.msra.mxu0 %v827
        %1083 = vmatpush.bf16.msra.mxu0 %v815
        %1084 = vmatpush.bf16.msra.mxu0 %v803
        %1085 = vmatpush.bf16.msra.mxu0 %v791
        %1086 = vmatpush.bf16.msra.mxu0 %v779
        %1087 = vmatmul.bf16.gmra.mxu0 %v387
        %v1088 = vpop.f32.mrf.mxu0
        %v1089 = vadd.f32 0.0, %v1088
        %v1090 = vpop.f32.mrf.mxu0
        %v1091 = vadd.f32 0.0, %v1090
        %1092 = vmatmul.bf16.gmra.mxu0 %v388
        %v1093 = vpop.f32.mrf.mxu0
        %v1094 = vadd.f32 0.0, %v1093
        %v1095 = vpop.f32.mrf.mxu0
        %v1096 = vadd.f32 0.0, %v1095
        %1097 = vdwg.mxu0
        %1098 = vmatpush.bf16.msra.mxu0 %v864
        %1099 = vmatpush.bf16.msra.mxu0 %v852
        %1100 = vmatpush.bf16.msra.mxu0 %v840
        %1101 = vmatpush.bf16.msra.mxu0 %v828
        %1102 = vmatpush.bf16.msra.mxu0 %v816
        %1103 = vmatpush.bf16.msra.mxu0 %v804
        %1104 = vmatpush.bf16.msra.mxu0 %v792
        %1105 = vmatpush.bf16.msra.mxu0 %v780
        %1106 = vmatmul.bf16.gmra.mxu0 %v387
        %v1107 = vpop.f32.mrf.mxu0
        %v1108 = vadd.f32 0.0, %v1107
        %v1109 = vpop.f32.mrf.mxu0
        %v1110 = vadd.f32 0.0, %v1109
        %1111 = vmatmul.bf16.gmra.mxu0 %v388
        %v1112 = vpop.f32.mrf.mxu0
        %v1113 = vadd.f32 0.0, %v1112
        %v1114 = vpop.f32.mrf.mxu0
        %v1115 = vadd.f32 0.0, %v1114
        %1116 = vdwg.mxu0
        %1117 = vmatpush.bf16.msra.mxu0 %v865
        %1118 = vmatpush.bf16.msra.mxu0 %v853
        %1119 = vmatpush.bf16.msra.mxu0 %v841
        %1120 = vmatpush.bf16.msra.mxu0 %v829
        %1121 = vmatpush.bf16.msra.mxu0 %v817
        %1122 = vmatpush.bf16.msra.mxu0 %v805
        %1123 = vmatpush.bf16.msra.mxu0 %v793
        %1124 = vmatpush.bf16.msra.mxu0 %v781
        %1125 = vmatmul.bf16.gmra.mxu0 %v387
        %v1126 = vpop.f32.mrf.mxu0
        %v1127 = vadd.f32 0.0, %v1126
        %v1128 = vpop.f32.mrf.mxu0
        %v1129 = vadd.f32 0.0, %v1128
        %1130 = vmatmul.bf16.gmra.mxu0 %v388
        %v1131 = vpop.f32.mrf.mxu0
        %v1132 = vadd.f32 0.0, %v1131
        %v1133 = vpop.f32.mrf.mxu0
        %v1134 = vadd.f32 0.0, %v1133
        %1135 = vdwg.mxu0
        %1136 = vmatpush.bf16.msra.mxu0 %v866
        %1137 = vmatpush.bf16.msra.mxu0 %v854
        %1138 = vmatpush.bf16.msra.mxu0 %v842
        %1139 = vmatpush.bf16.msra.mxu0 %v830
        %1140 = vmatpush.bf16.msra.mxu0 %v818
        %1141 = vmatpush.bf16.msra.mxu0 %v806
        %1142 = vmatpush.bf16.msra.mxu0 %v794
        %1143 = vmatpush.bf16.msra.mxu0 %v782
        %1144 = vmatmul.bf16.gmra.mxu0 %v387
        %v1145 = vpop.f32.mrf.mxu0
        %v1146 = vadd.f32 0.0, %v1145
        %v1147 = vpop.f32.mrf.mxu0
        %v1148 = vadd.f32 0.0, %v1147
        %1149 = vmatmul.bf16.gmra.mxu0 %v388
        %v1150 = vpop.f32.mrf.mxu0
        %v1151 = vadd.f32 0.0, %v1150
        %v1152 = vpop.f32.mrf.mxu0
        %v1153 = vadd.f32 0.0, %v1152
        %1154 = vdwg.mxu0
        %1155 = vmatpush.bf16.msra.mxu0 %v867
        %1156 = vmatpush.bf16.msra.mxu0 %v855
        %1157 = vmatpush.bf16.msra.mxu0 %v843
        %1158 = vmatpush.bf16.msra.mxu0 %v831
        %1159 = vmatpush.bf16.msra.mxu0 %v819
        %1160 = vmatpush.bf16.msra.mxu0 %v807
        %1161 = vmatpush.bf16.msra.mxu0 %v795
        %1162 = vmatpush.bf16.msra.mxu0 %v783
        %1163 = vmatmul.bf16.gmra.mxu0 %v387
        %v1164 = vpop.f32.mrf.mxu0
        %v1165 = vadd.f32 0.0, %v1164
        %v1166 = vpop.f32.mrf.mxu0
        %v1167 = vadd.f32 0.0, %v1166
        %1168 = vmatmul.bf16.gmra.mxu0 %v388
        %v1169 = vpop.f32.mrf.mxu0
        %v1170 = vadd.f32 0.0, %v1169
        %v1171 = vpop.f32.mrf.mxu0
        %v1172 = vadd.f32 0.0, %v1171
        %1173 = vdwg.mxu0
        %1174 = vmatpush.bf16.msra.mxu0 %v868
        %1175 = vmatpush.bf16.msra.mxu0 %v856
        %1176 = vmatpush.bf16.msra.mxu0 %v844
        %1177 = vmatpush.bf16.msra.mxu0 %v832
        %1178 = vmatpush.bf16.msra.mxu0 %v820
        %1179 = vmatpush.bf16.msra.mxu0 %v808
        %1180 = vmatpush.bf16.msra.mxu0 %v796
        %1181 = vmatpush.bf16.msra.mxu0 %v784
        %1182 = vmatmul.bf16.gmra.mxu0 %v387
        %v1183 = vpop.f32.mrf.mxu0
        %v1184 = vadd.f32 0.0, %v1183
        %v1185 = vpop.f32.mrf.mxu0
        %v1186 = vadd.f32 0.0, %v1185
        %1187 = vmatmul.bf16.gmra.mxu0 %v388
        %v1188 = vpop.f32.mrf.mxu0
        %v1189 = vadd.f32 0.0, %v1188
        %v1190 = vpop.f32.mrf.mxu0
        %v1191 = vadd.f32 0.0, %v1190
        %1192 = vdwg.mxu0
        %1193 = vst [vmem:[#allocation2] sm:$0xff] %v975
        %1194 = vst [vmem:[#allocation2 + $0x8] sm:$0xff] %v994
        %1195 = vst [vmem:[#allocation2 + $0x10] sm:$0xff] %v1013
        %1196 = vst [vmem:[#allocation2 + $0x18] sm:$0xff] %v1032
        %1197 = vst [vmem:[#allocation2 + $0x20] sm:$0xff] %v1051
        %1198 = vst [vmem:[#allocation2 + $0x28] sm:$0xff] %v1070
        %1199 = vst [vmem:[#allocation2 + $0x30] sm:$0xff] %v1089
        %1200 = vst [vmem:[#allocation2 + $0x38] sm:$0xff] %v1108
        %1201 = vst [vmem:[#allocation2 + $0x40] sm:$0xff] %v1127
        %1202 = vst [vmem:[#allocation2 + $0x48] sm:$0xff] %v1146
        %1203 = vst [vmem:[#allocation2 + $0x50] sm:$0xff] %v1165
        %1204 = vst [vmem:[#allocation2 + $0x58] sm:$0xff] %v1184
        %1205 = vst [vmem:[#allocation2 + $0x60] sm:$0xff] %v977
        %1206 = vst [vmem:[#allocation2 + $0x68] sm:$0xff] %v996
        %1207 = vst [vmem:[#allocation2 + $0x70] sm:$0xff] %v1015
        %1208 = vst [vmem:[#allocation2 + $0x78] sm:$0xff] %v1034
        %1209 = vst [vmem:[#allocation2 + $0x80] sm:$0xff] %v1053
        %1210 = vst [vmem:[#allocation2 + $0x88] sm:$0xff] %v1072
        %1211 = vst [vmem:[#allocation2 + $0x90] sm:$0xff] %v1091
        %1212 = vst [vmem:[#allocation2 + $0x98] sm:$0xff] %v1110
        %1213 = vst [vmem:[#allocation2 + $0xa0] sm:$0xff] %v1129
        %1214 = vst [vmem:[#allocation2 + $0xa8] sm:$0xff] %v1148
        %1215 = vst [vmem:[#allocation2 + $0xb0] sm:$0xff] %v1167
        %1216 = vst [vmem:[#allocation2 + $0xb8] sm:$0xff] %v1186
        %1217 = vst [vmem:[#allocation2 + $0xc0] sm:$0xff] %v980
        %1218 = vst [vmem:[#allocation2 + $0xc8] sm:$0xff] %v999
        %1219 = vst [vmem:[#allocation2 + $0xd0] sm:$0xff] %v1018
        %1220 = vst [vmem:[#allocation2 + $0xd8] sm:$0xff] %v1037
        %1221 = vst [vmem:[#allocation2 + $0xe0] sm:$0xff] %v1056
        %1222 = vst [vmem:[#allocation2 + $0xe8] sm:$0xff] %v1075
        %1223 = vst [vmem:[#allocation2 + $0xf0] sm:$0xff] %v1094
        %1224 = vst [vmem:[#allocation2 + $0xf8] sm:$0xff] %v1113
        %1225 = vst [vmem:[#allocation2 + $0x100] sm:$0xff] %v1132
        %1226 = vst [vmem:[#allocation2 + $0x108] sm:$0xff] %v1151
        %1227 = vst [vmem:[#allocation2 + $0x110] sm:$0xff] %v1170
        %1228 = vst [vmem:[#allocation2 + $0x118] sm:$0xff] %v1189
        %1229 = vst [vmem:[#allocation2 + $0x120] sm:$0xff] %v982
        %1230 = vst [vmem:[#allocation2 + $0x128] sm:$0xff] %v1001
        %1231 = vst [vmem:[#allocation2 + $0x130] sm:$0xff] %v1020
        %1232 = vst [vmem:[#allocation2 + $0x138] sm:$0xff] %v1039
        %1233 = vst [vmem:[#allocation2 + $0x140] sm:$0xff] %v1058
        %1234 = vst [vmem:[#allocation2 + $0x148] sm:$0xff] %v1077
        %1235 = vst [vmem:[#allocation2 + $0x150] sm:$0xff] %v1096
        %1236 = vst [vmem:[#allocation2 + $0x158] sm:$0xff] %v1115
        %1237 = vst [vmem:[#allocation2 + $0x160] sm:$0xff] %v1134
        %1238 = vst [vmem:[#allocation2 + $0x168] sm:$0xff] %v1153
        %1239 = vst [vmem:[#allocation2 + $0x170] sm:$0xff] %v1172
        %1240 = vst [vmem:[#allocation2 + $0x178] sm:$0xff] %v1191
        %v1241 = vld [vmem:[#allocation12] sm:$0xff]
        %v1242 = vld [vmem:[#allocation12 + $0x8] sm:$0xff]
        %v1243 = vld [vmem:[#allocation12 + $0x10] sm:$0xff]
        %v1244 = vld [vmem:[#allocation12 + $0x18] sm:$0xff]
        %v1245 = vld [vmem:[#allocation13] sm:$0xff]
        %v1246 = vld [vmem:[#allocation13 + $0x8] sm:$0xff]
        %v1247 = vld [vmem:[#allocation13 + $0x10] sm:$0xff]
        %v1248 = vld [vmem:[#allocation13 + $0x18] sm:$0xff]
        %v1249 = vld [vmem:[#allocation2] sm:$0xff]
        %v1250 = vld [vmem:[#allocation2 + $0x60] sm:$0xff]
        %v1251 = vld [vmem:[#allocation2 + $0xc0] sm:$0xff]
        %v1252 = vld [vmem:[#allocation2 + $0x120] sm:$0xff]
        %v1253 = vld [vmem:[#allocation2 + $0x20] sm:$0xff]
        %v1254 = vld [vmem:[#allocation2 + $0x80] sm:$0xff]
        %v1255 = vld [vmem:[#allocation2 + $0xe0] sm:$0xff]
        %v1256 = vld [vmem:[#allocation2 + $0x140] sm:$0xff]
        %v1257 = vld [vmem:[#allocation2 + $0x40] sm:$0xff]
        %v1258 = vld [vmem:[#allocation2 + $0xa0] sm:$0xff]
        %v1259 = vld [vmem:[#allocation2 + $0x100] sm:$0xff]
        %v1260 = vld [vmem:[#allocation2 + $0x160] sm:$0xff]
        %v1261 = vmul.f32 %v1249, %v1241
        %v1262 = vmul.f32 %v1250, %v1242
        %v1263 = vmul.f32 %v1251, %v1243
        %v1264 = vmul.f32 %v1252, %v1244
        %1265 = vrot.lane.b32.xlu0 %v1249, 64
        %v1266 = vpop.permute.xlu0 %1265
        %1267 = vrot.lane.b32.xlu0 %v1250, 64
        %v1268 = vpop.permute.xlu0 %1267
        %1269 = vrot.lane.b32.xlu0 %v1251, 64
        %v1270 = vpop.permute.xlu0 %1269
        %1271 = vrot.lane.b32.xlu0 %v1252, 64
        %v1272 = vpop.permute.xlu0 %1271
        %v1273 = vmul.f32 %v1266, %v1245
        %v1274 = vmul.f32 %v1268, %v1246
        %v1275 = vmul.f32 %v1270, %v1247
        %v1276 = vmul.f32 %v1272, %v1248
        %v1277 = vadd.f32 %v1261, %v1273
        %v1278 = vadd.f32 %v1262, %v1274
        %v1279 = vadd.f32 %v1263, %v1275
        %v1280 = vadd.f32 %v1264, %v1276
        %v1281 = vmul.f32 %v1253, %v1241
        %v1282 = vmul.f32 %v1254, %v1242
        %v1283 = vmul.f32 %v1255, %v1243
        %v1284 = vmul.f32 %v1256, %v1244
        %1285 = vrot.lane.b32.xlu0 %v1253, 64
        %v1286 = vpop.permute.xlu0 %1285
        %1287 = vrot.lane.b32.xlu0 %v1254, 64
        %v1288 = vpop.permute.xlu0 %1287
        %1289 = vrot.lane.b32.xlu0 %v1255, 64
        %v1290 = vpop.permute.xlu0 %1289
        %1291 = vrot.lane.b32.xlu0 %v1256, 64
        %v1292 = vpop.permute.xlu0 %1291
        %v1293 = vmul.f32 %v1286, %v1245
        %v1294 = vmul.f32 %v1288, %v1246
        %v1295 = vmul.f32 %v1290, %v1247
        %v1296 = vmul.f32 %v1292, %v1248
        %v1297 = vadd.f32 %v1281, %v1293
        %v1298 = vadd.f32 %v1282, %v1294
        %v1299 = vadd.f32 %v1283, %v1295
        %v1300 = vadd.f32 %v1284, %v1296
        %v1301 = vpack.c.bf16 %v1277, %v1277
        %v1302 = vpack.c.bf16 %v1278, %v1278
        %v1303 = vpack.c.bf16 %v1279, %v1279
        %v1304 = vpack.c.bf16 %v1280, %v1280
        %1305 = vst [vmem:[#allocation3] sm:$0xf] %v1301
        %1306 = vst [vmem:[#allocation3 + $0x4] sm:$0xf] %v1302
        %1307 = vst [vmem:[#allocation3 + $0x8] sm:$0xf] %v1303
        %1308 = vst [vmem:[#allocation3 + $0xc] sm:$0xf] %v1304
        %v1309 = vpack.c.bf16 %v1297, %v1297
        %v1310 = vpack.c.bf16 %v1298, %v1298
        %v1311 = vpack.c.bf16 %v1299, %v1299
        %v1312 = vpack.c.bf16 %v1300, %v1300
        %1313 = vst [vmem:[#allocation4] sm:$0xf] %v1309
        %1314 = vst [vmem:[#allocation4 + $0x4] sm:$0xf] %v1310
        %1315 = vst [vmem:[#allocation4 + $0x8] sm:$0xf] %v1311
        %1316 = vst [vmem:[#allocation4 + $0xc] sm:$0xf] %v1312
        %v1317 = vpack.c.bf16 %v1257, %v1257
        %v1318 = vpack.c.bf16 %v1258, %v1258
        %v1319 = vpack.c.bf16 %v1259, %v1259
        %v1320 = vpack.c.bf16 %v1260, %v1260
        %1321 = vst [vmem:[#allocation5] sm:$0xf] %v1317
        %1322 = vst [vmem:[#allocation5 + $0x4] sm:$0xf] %v1318
        %1323 = vst [vmem:[#allocation5 + $0x8] sm:$0xf] %v1319
        %1324 = vst [vmem:[#allocation5 + $0xc] sm:$0xf] %v1320
        %v1325 = vld [vmem:[#allocation2 + $0x8] sm:$0xff]
        %v1326 = vld [vmem:[#allocation2 + $0x68] sm:$0xff]
        %v1327 = vld [vmem:[#allocation2 + $0xc8] sm:$0xff]
        %v1328 = vld [vmem:[#allocation2 + $0x128] sm:$0xff]
        %v1329 = vld [vmem:[#allocation2 + $0x28] sm:$0xff]
        %v1330 = vld [vmem:[#allocation2 + $0x88] sm:$0xff]
        %v1331 = vld [vmem:[#allocation2 + $0xe8] sm:$0xff]
        %v1332 = vld [vmem:[#allocation2 + $0x148] sm:$0xff]
        %v1333 = vld [vmem:[#allocation2 + $0x48] sm:$0xff]
        %v1334 = vld [vmem:[#allocation2 + $0xa8] sm:$0xff]
        %v1335 = vld [vmem:[#allocation2 + $0x108] sm:$0xff]
        %v1336 = vld [vmem:[#allocation2 + $0x168] sm:$0xff]
        %v1337 = vmul.f32 %v1325, %v1241
        %v1338 = vmul.f32 %v1326, %v1242
        %v1339 = vmul.f32 %v1327, %v1243
        %v1340 = vmul.f32 %v1328, %v1244
        %1341 = vrot.lane.b32.xlu0 %v1325, 64
        %v1342 = vpop.permute.xlu0 %1341
        %1343 = vrot.lane.b32.xlu0 %v1326, 64
        %v1344 = vpop.permute.xlu0 %1343
        %1345 = vrot.lane.b32.xlu0 %v1327, 64
        %v1346 = vpop.permute.xlu0 %1345
        %1347 = vrot.lane.b32.xlu0 %v1328, 64
        %v1348 = vpop.permute.xlu0 %1347
        %v1349 = vmul.f32 %v1342, %v1245
        %v1350 = vmul.f32 %v1344, %v1246
        %v1351 = vmul.f32 %v1346, %v1247
        %v1352 = vmul.f32 %v1348, %v1248
        %v1353 = vadd.f32 %v1337, %v1349
        %v1354 = vadd.f32 %v1338, %v1350
        %v1355 = vadd.f32 %v1339, %v1351
        %v1356 = vadd.f32 %v1340, %v1352
        %v1357 = vmul.f32 %v1329, %v1241
        %v1358 = vmul.f32 %v1330, %v1242
        %v1359 = vmul.f32 %v1331, %v1243
        %v1360 = vmul.f32 %v1332, %v1244
        %1361 = vrot.lane.b32.xlu0 %v1329, 64
        %v1362 = vpop.permute.xlu0 %1361
        %1363 = vrot.lane.b32.xlu0 %v1330, 64
        %v1364 = vpop.permute.xlu0 %1363
        %1365 = vrot.lane.b32.xlu0 %v1331, 64
        %v1366 = vpop.permute.xlu0 %1365
        %1367 = vrot.lane.b32.xlu0 %v1332, 64
        %v1368 = vpop.permute.xlu0 %1367
        %v1369 = vmul.f32 %v1362, %v1245
        %v1370 = vmul.f32 %v1364, %v1246
        %v1371 = vmul.f32 %v1366, %v1247
        %v1372 = vmul.f32 %v1368, %v1248
        %v1373 = vadd.f32 %v1357, %v1369
        %v1374 = vadd.f32 %v1358, %v1370
        %v1375 = vadd.f32 %v1359, %v1371
        %v1376 = vadd.f32 %v1360, %v1372
        %v1377 = vpack.c.bf16 %v1353, %v1353
        %v1378 = vpack.c.bf16 %v1354, %v1354
        %v1379 = vpack.c.bf16 %v1355, %v1355
        %v1380 = vpack.c.bf16 %v1356, %v1356
        %s1381 = scalar_lea.vmem [#allocation3], 16
        %1382 = vst [vmem:[%s1381] sm:$0xf] %v1377
        %1383 = vst [vmem:[%s1381 + $0x4] sm:$0xf] %v1378
        %1384 = vst [vmem:[%s1381 + $0x8] sm:$0xf] %v1379
        %1385 = vst [vmem:[%s1381 + $0xc] sm:$0xf] %v1380
        %v1386 = vpack.c.bf16 %v1373, %v1373
        %v1387 = vpack.c.bf16 %v1374, %v1374
        %v1388 = vpack.c.bf16 %v1375, %v1375
        %v1389 = vpack.c.bf16 %v1376, %v1376
        %s1390 = scalar_lea.vmem [#allocation4], 16
        %1391 = vst [vmem:[%s1390] sm:$0xf] %v1386
        %1392 = vst [vmem:[%s1390 + $0x4] sm:$0xf] %v1387
        %1393 = vst [vmem:[%s1390 + $0x8] sm:$0xf] %v1388
        %1394 = vst [vmem:[%s1390 + $0xc] sm:$0xf] %v1389
        %v1395 = vpack.c.bf16 %v1333, %v1333
        %v1396 = vpack.c.bf16 %v1334, %v1334
        %v1397 = vpack.c.bf16 %v1335, %v1335
        %v1398 = vpack.c.bf16 %v1336, %v1336
        %s1399 = scalar_lea.vmem [#allocation5], 16
        %1400 = vst [vmem:[%s1399] sm:$0xf] %v1395
        %1401 = vst [vmem:[%s1399 + $0x4] sm:$0xf] %v1396
        %1402 = vst [vmem:[%s1399 + $0x8] sm:$0xf] %v1397
        %1403 = vst [vmem:[%s1399 + $0xc] sm:$0xf] %v1398
        %v1404 = vld [vmem:[#allocation2 + $0x10] sm:$0xff]
        %v1405 = vld [vmem:[#allocation2 + $0x70] sm:$0xff]
        %v1406 = vld [vmem:[#allocation2 + $0xd0] sm:$0xff]
        %v1407 = vld [vmem:[#allocation2 + $0x130] sm:$0xff]
        %v1408 = vld [vmem:[#allocation2 + $0x30] sm:$0xff]
        %v1409 = vld [vmem:[#allocation2 + $0x90] sm:$0xff]
        %v1410 = vld [vmem:[#allocation2 + $0xf0] sm:$0xff]
        %v1411 = vld [vmem:[#allocation2 + $0x150] sm:$0xff]
        %v1412 = vld [vmem:[#allocation2 + $0x50] sm:$0xff]
        %v1413 = vld [vmem:[#allocation2 + $0xb0] sm:$0xff]
        %v1414 = vld [vmem:[#allocation2 + $0x110] sm:$0xff]
        %v1415 = vld [vmem:[#allocation2 + $0x170] sm:$0xff]
        %v1416 = vmul.f32 %v1404, %v1241
        %v1417 = vmul.f32 %v1405, %v1242
        %v1418 = vmul.f32 %v1406, %v1243
        %v1419 = vmul.f32 %v1407, %v1244
        %1420 = vrot.lane.b32.xlu0 %v1404, 64
        %v1421 = vpop.permute.xlu0 %1420
        %1422 = vrot.lane.b32.xlu0 %v1405, 64
        %v1423 = vpop.permute.xlu0 %1422
        %1424 = vrot.lane.b32.xlu0 %v1406, 64
        %v1425 = vpop.permute.xlu0 %1424
        %1426 = vrot.lane.b32.xlu0 %v1407, 64
        %v1427 = vpop.permute.xlu0 %1426
        %v1428 = vmul.f32 %v1421, %v1245
        %v1429 = vmul.f32 %v1423, %v1246
        %v1430 = vmul.f32 %v1425, %v1247
        %v1431 = vmul.f32 %v1427, %v1248
        %v1432 = vadd.f32 %v1416, %v1428
        %v1433 = vadd.f32 %v1417, %v1429
        %v1434 = vadd.f32 %v1418, %v1430
        %v1435 = vadd.f32 %v1419, %v1431
        %v1436 = vmul.f32 %v1408, %v1241
        %v1437 = vmul.f32 %v1409, %v1242
        %v1438 = vmul.f32 %v1410, %v1243
        %v1439 = vmul.f32 %v1411, %v1244
        %1440 = vrot.lane.b32.xlu0 %v1408, 64
        %v1441 = vpop.permute.xlu0 %1440
        %1442 = vrot.lane.b32.xlu0 %v1409, 64
        %v1443 = vpop.permute.xlu0 %1442
        %1444 = vrot.lane.b32.xlu0 %v1410, 64
        %v1445 = vpop.permute.xlu0 %1444
        %1446 = vrot.lane.b32.xlu0 %v1411, 64
        %v1447 = vpop.permute.xlu0 %1446
        %v1448 = vmul.f32 %v1441, %v1245
        %v1449 = vmul.f32 %v1443, %v1246
        %v1450 = vmul.f32 %v1445, %v1247
        %v1451 = vmul.f32 %v1447, %v1248
        %v1452 = vadd.f32 %v1436, %v1448
        %v1453 = vadd.f32 %v1437, %v1449
        %v1454 = vadd.f32 %v1438, %v1450
        %v1455 = vadd.f32 %v1439, %v1451
        %v1456 = vpack.c.bf16 %v1432, %v1432
        %v1457 = vpack.c.bf16 %v1433, %v1433
        %v1458 = vpack.c.bf16 %v1434, %v1434
        %v1459 = vpack.c.bf16 %v1435, %v1435
        %s1460 = scalar_lea.vmem [#allocation3], 32
        %1461 = vst [vmem:[%s1460] sm:$0xf] %v1456
        %1462 = vst [vmem:[%s1460 + $0x4] sm:$0xf] %v1457
        %1463 = vst [vmem:[%s1460 + $0x8] sm:$0xf] %v1458
        %1464 = vst [vmem:[%s1460 + $0xc] sm:$0xf] %v1459
        %v1465 = vpack.c.bf16 %v1452, %v1452
        %v1466 = vpack.c.bf16 %v1453, %v1453
        %v1467 = vpack.c.bf16 %v1454, %v1454
        %v1468 = vpack.c.bf16 %v1455, %v1455
        %s1469 = scalar_lea.vmem [#allocation4], 32
        %1470 = vst [vmem:[%s1469] sm:$0xf] %v1465
        %1471 = vst [vmem:[%s1469 + $0x4] sm:$0xf] %v1466
        %1472 = vst [vmem:[%s1469 + $0x8] sm:$0xf] %v1467
        %1473 = vst [vmem:[%s1469 + $0xc] sm:$0xf] %v1468
        %v1474 = vpack.c.bf16 %v1412, %v1412
        %v1475 = vpack.c.bf16 %v1413, %v1413
        %v1476 = vpack.c.bf16 %v1414, %v1414
        %v1477 = vpack.c.bf16 %v1415, %v1415
        %s1478 = scalar_lea.vmem [#allocation5], 32
        %1479 = vst [vmem:[%s1478] sm:$0xf] %v1474
        %1480 = vst [vmem:[%s1478 + $0x4] sm:$0xf] %v1475
        %1481 = vst [vmem:[%s1478 + $0x8] sm:$0xf] %v1476
        %1482 = vst [vmem:[%s1478 + $0xc] sm:$0xf] %v1477
        %v1483 = vld [vmem:[#allocation2 + $0x18] sm:$0xff]
        %v1484 = vld [vmem:[#allocation2 + $0x78] sm:$0xff]
        %v1485 = vld [vmem:[#allocation2 + $0xd8] sm:$0xff]
        %v1486 = vld [vmem:[#allocation2 + $0x138] sm:$0xff]
        %v1487 = vld [vmem:[#allocation2 + $0x38] sm:$0xff]
        %v1488 = vld [vmem:[#allocation2 + $0x98] sm:$0xff]
        %v1489 = vld [vmem:[#allocation2 + $0xf8] sm:$0xff]
        %v1490 = vld [vmem:[#allocation2 + $0x158] sm:$0xff]
        %v1491 = vld [vmem:[#allocation2 + $0x58] sm:$0xff]
        %v1492 = vld [vmem:[#allocation2 + $0xb8] sm:$0xff]
        %v1493 = vld [vmem:[#allocation2 + $0x118] sm:$0xff]
        %v1494 = vld [vmem:[#allocation2 + $0x178] sm:$0xff]
        %v1495 = vmul.f32 %v1483, %v1241
        %v1496 = vmul.f32 %v1484, %v1242
        %v1497 = vmul.f32 %v1485, %v1243
        %v1498 = vmul.f32 %v1486, %v1244
        %1499 = vrot.lane.b32.xlu0 %v1483, 64
        %v1500 = vpop.permute.xlu0 %1499
        %1501 = vrot.lane.b32.xlu0 %v1484, 64
        %v1502 = vpop.permute.xlu0 %1501
        %1503 = vrot.lane.b32.xlu0 %v1485, 64
        %v1504 = vpop.permute.xlu0 %1503
        %1505 = vrot.lane.b32.xlu0 %v1486, 64
        %v1506 = vpop.permute.xlu0 %1505
        %v1507 = vmul.f32 %v1500, %v1245
        %v1508 = vmul.f32 %v1502, %v1246
        %v1509 = vmul.f32 %v1504, %v1247
        %v1510 = vmul.f32 %v1506, %v1248
        %v1511 = vadd.f32 %v1495, %v1507
        %v1512 = vadd.f32 %v1496, %v1508
        %v1513 = vadd.f32 %v1497, %v1509
        %v1514 = vadd.f32 %v1498, %v1510
        %v1515 = vmul.f32 %v1487, %v1241
        %v1516 = vmul.f32 %v1488, %v1242
        %v1517 = vmul.f32 %v1489, %v1243
        %v1518 = vmul.f32 %v1490, %v1244
        %1519 = vrot.lane.b32.xlu0 %v1487, 64
        %v1520 = vpop.permute.xlu0 %1519
        %1521 = vrot.lane.b32.xlu0 %v1488, 64
        %v1522 = vpop.permute.xlu0 %1521
        %1523 = vrot.lane.b32.xlu0 %v1489, 64
        %v1524 = vpop.permute.xlu0 %1523
        %1525 = vrot.lane.b32.xlu0 %v1490, 64
        %v1526 = vpop.permute.xlu0 %1525
        %v1527 = vmul.f32 %v1520, %v1245
        %v1528 = vmul.f32 %v1522, %v1246
        %v1529 = vmul.f32 %v1524, %v1247
        %v1530 = vmul.f32 %v1526, %v1248
        %v1531 = vadd.f32 %v1515, %v1527
        %v1532 = vadd.f32 %v1516, %v1528
        %v1533 = vadd.f32 %v1517, %v1529
        %v1534 = vadd.f32 %v1518, %v1530
        %v1535 = vpack.c.bf16 %v1511, %v1511
        %v1536 = vpack.c.bf16 %v1512, %v1512
        %v1537 = vpack.c.bf16 %v1513, %v1513
        %v1538 = vpack.c.bf16 %v1514, %v1514
        %s1539 = scalar_lea.vmem [#allocation3], 48
        %1540 = vst [vmem:[%s1539] sm:$0xf] %v1535
        %1541 = vst [vmem:[%s1539 + $0x4] sm:$0xf] %v1536
        %1542 = vst [vmem:[%s1539 + $0x8] sm:$0xf] %v1537
        %1543 = vst [vmem:[%s1539 + $0xc] sm:$0xf] %v1538
        %v1544 = vpack.c.bf16 %v1531, %v1531
        %v1545 = vpack.c.bf16 %v1532, %v1532
        %v1546 = vpack.c.bf16 %v1533, %v1533
        %v1547 = vpack.c.bf16 %v1534, %v1534
        %s1548 = scalar_lea.vmem [#allocation4], 48
        %1549 = vst [vmem:[%s1548] sm:$0xf] %v1544
        %1550 = vst [vmem:[%s1548 + $0x4] sm:$0xf] %v1545
        %1551 = vst [vmem:[%s1548 + $0x8] sm:$0xf] %v1546
        %1552 = vst [vmem:[%s1548 + $0xc] sm:$0xf] %v1547
        %v1553 = vpack.c.bf16 %v1491, %v1491
        %v1554 = vpack.c.bf16 %v1492, %v1492
        %v1555 = vpack.c.bf16 %v1493, %v1493
        %v1556 = vpack.c.bf16 %v1494, %v1494
        %s1557 = scalar_lea.vmem [#allocation5], 48
        %1558 = vst [vmem:[%s1557] sm:$0xf] %v1553
        %1559 = vst [vmem:[%s1557 + $0x4] sm:$0xf] %v1554
        %1560 = vst [vmem:[%s1557 + $0x8] sm:$0xf] %v1555
        %1561 = vst [vmem:[%s1557 + $0xc] sm:$0xf] %v1556
        %v1562 = vld [vmem:[#allocation3] sm:$0xf]
        %v1563 = vld [vmem:[#allocation3 + $0x4] sm:$0xf]
        %v1564 = vld [vmem:[#allocation3 + $0x8] sm:$0xf]
        %v1565 = vld [vmem:[#allocation3 + $0xc] sm:$0xf]
        %v1566 = vld [vmem:[#allocation3 + $0x10] sm:$0xf]
        %v1567 = vld [vmem:[#allocation3 + $0x14] sm:$0xf]
        %v1568 = vld [vmem:[#allocation3 + $0x18] sm:$0xf]
        %v1569 = vld [vmem:[#allocation3 + $0x1c] sm:$0xf]
        %v1570 = vld [vmem:[#allocation3 + $0x20] sm:$0xf]
        %v1571 = vld [vmem:[#allocation3 + $0x24] sm:$0xf]
        %v1572 = vld [vmem:[#allocation3 + $0x28] sm:$0xf]
        %v1573 = vld [vmem:[#allocation3 + $0x2c] sm:$0xf]
        %v1574 = vld [vmem:[#allocation3 + $0x30] sm:$0xf]
        %v1575 = vld [vmem:[#allocation3 + $0x34] sm:$0xf]
        %v1576 = vld [vmem:[#allocation3 + $0x38] sm:$0xf]
        %v1577 = vld [vmem:[#allocation3 + $0x3c] sm:$0xf]
        %v1578 = vld [vmem:[#allocation4] sm:$0xf]
        %v1579 = vld [vmem:[#allocation4 + $0x4] sm:$0xf]
        %v1580 = vld [vmem:[#allocation4 + $0x8] sm:$0xf]
        %v1581 = vld [vmem:[#allocation4 + $0xc] sm:$0xf]
        %v1582 = vld [vmem:[#allocation4 + $0x10] sm:$0xf]
        %v1583 = vld [vmem:[#allocation4 + $0x14] sm:$0xf]
        %v1584 = vld [vmem:[#allocation4 + $0x18] sm:$0xf]
        %v1585 = vld [vmem:[#allocation4 + $0x1c] sm:$0xf]
        %v1586 = vld [vmem:[#allocation4 + $0x20] sm:$0xf]
        %v1587 = vld [vmem:[#allocation4 + $0x24] sm:$0xf]
        %v1588 = vld [vmem:[#allocation4 + $0x28] sm:$0xf]
        %v1589 = vld [vmem:[#allocation4 + $0x2c] sm:$0xf]
        %v1590 = vld [vmem:[#allocation4 + $0x30] sm:$0xf]
        %v1591 = vld [vmem:[#allocation4 + $0x34] sm:$0xf]
        %v1592 = vld [vmem:[#allocation4 + $0x38] sm:$0xf]
        %v1593 = vld [vmem:[#allocation4 + $0x3c] sm:$0xf]
        %v1596 = vunpack.c.l.b16 %v1562
        %v1597 = vunpack.c.l.b16 %v1563
        %v1598 = vpack.c.b16 %v1597, %v1596
        %v1602 = vunpack.c.l.b16 %v1578
        %v1603 = vunpack.c.l.b16 %v1579
        %v1604 = vpack.c.b16 %v1603, %v1602
        %1606 = vmatpush.bf16.xpose.msra.mxu0 0
        %1607 = vmatpush.bf16.xpose.msra.mxu0 0
        %1608 = vmatpush.bf16.xpose.msra.mxu0 0
        %1609 = vmatpush.bf16.xpose.msra.mxu0 0
        %1610 = vmatpush.bf16.xpose.msra.mxu0 0
        %1611 = vmatpush.bf16.xpose.msra.mxu0 0
        %1612 = vmatpush.bf16.xpose.msra.mxu0 0
        %1613 = vmatpush.bf16.xpose.msra.mxu0 %v1604
        %1614 = vmatmul.bf16.gmra.mxu0 %v1598
        %v1615 = vpop.f32.mrf.mxu0
        %v1616 = vadd.f32 0.0, %v1615
        %v1617 = vpop.f32.mrf.mxu0
        %v1618 = vadd.f32 0.0, %v1617
        %1619 = vdwg.mxu0
        %v1622 = vunpack.c.l.b16 %v1564
        %v1623 = vunpack.c.l.b16 %v1565
        %v1624 = vpack.c.b16 %v1623, %v1622
        %v1628 = vunpack.c.l.b16 %v1580
        %v1629 = vunpack.c.l.b16 %v1581
        %v1630 = vpack.c.b16 %v1629, %v1628
        %1632 = vmatpush.bf16.xpose.msra.mxu0 0
        %1633 = vmatpush.bf16.xpose.msra.mxu0 0
        %1634 = vmatpush.bf16.xpose.msra.mxu0 0
        %1635 = vmatpush.bf16.xpose.msra.mxu0 0
        %1636 = vmatpush.bf16.xpose.msra.mxu0 0
        %1637 = vmatpush.bf16.xpose.msra.mxu0 0
        %1638 = vmatpush.bf16.xpose.msra.mxu0 0
        %1639 = vmatpush.bf16.xpose.msra.mxu0 %v1630
        %1640 = vmatmul.bf16.gmra.mxu0 %v1624
        %v1641 = vpop.f32.mrf.mxu0
        %v1642 = vadd.f32 0.0, %v1641
        %v1643 = vpop.f32.mrf.mxu0
        %v1644 = vadd.f32 0.0, %v1643
        %1645 = vdwg.mxu0
        %v1648 = vunpack.c.l.b16 %v1566
        %v1649 = vunpack.c.l.b16 %v1567
        %v1650 = vpack.c.b16 %v1649, %v1648
        %v1654 = vunpack.c.l.b16 %v1582
        %v1655 = vunpack.c.l.b16 %v1583
        %v1656 = vpack.c.b16 %v1655, %v1654
        %1658 = vmatpush.bf16.xpose.msra.mxu0 0
        %1659 = vmatpush.bf16.xpose.msra.mxu0 0
        %1660 = vmatpush.bf16.xpose.msra.mxu0 0
        %1661 = vmatpush.bf16.xpose.msra.mxu0 0
        %1662 = vmatpush.bf16.xpose.msra.mxu0 0
        %1663 = vmatpush.bf16.xpose.msra.mxu0 0
        %1664 = vmatpush.bf16.xpose.msra.mxu0 0
        %1665 = vmatpush.bf16.xpose.msra.mxu0 %v1656
        %1666 = vmatmul.bf16.gmra.mxu0 %v1650
        %v1667 = vpop.f32.mrf.mxu0
        %v1668 = vadd.f32 0.0, %v1667
        %v1669 = vpop.f32.mrf.mxu0
        %v1670 = vadd.f32 0.0, %v1669
        %1671 = vdwg.mxu0
        %v1674 = vunpack.c.l.b16 %v1568
        %v1675 = vunpack.c.l.b16 %v1569
        %v1676 = vpack.c.b16 %v1675, %v1674
        %v1680 = vunpack.c.l.b16 %v1584
        %v1681 = vunpack.c.l.b16 %v1585
        %v1682 = vpack.c.b16 %v1681, %v1680
        %1684 = vmatpush.bf16.xpose.msra.mxu0 0
        %1685 = vmatpush.bf16.xpose.msra.mxu0 0
        %1686 = vmatpush.bf16.xpose.msra.mxu0 0
        %1687 = vmatpush.bf16.xpose.msra.mxu0 0
        %1688 = vmatpush.bf16.xpose.msra.mxu0 0
        %1689 = vmatpush.bf16.xpose.msra.mxu0 0
        %1690 = vmatpush.bf16.xpose.msra.mxu0 0
        %1691 = vmatpush.bf16.xpose.msra.mxu0 %v1682
        %1692 = vmatmul.bf16.gmra.mxu0 %v1676
        %v1693 = vpop.f32.mrf.mxu0
        %v1694 = vadd.f32 0.0, %v1693
        %v1695 = vpop.f32.mrf.mxu0
        %v1696 = vadd.f32 0.0, %v1695
        %1697 = vdwg.mxu0
        %v1700 = vunpack.c.l.b16 %v1570
        %v1701 = vunpack.c.l.b16 %v1571
        %v1702 = vpack.c.b16 %v1701, %v1700
        %v1706 = vunpack.c.l.b16 %v1586
        %v1707 = vunpack.c.l.b16 %v1587
        %v1708 = vpack.c.b16 %v1707, %v1706
        %1710 = vmatpush.bf16.xpose.msra.mxu0 0
        %1711 = vmatpush.bf16.xpose.msra.mxu0 0
        %1712 = vmatpush.bf16.xpose.msra.mxu0 0
        %1713 = vmatpush.bf16.xpose.msra.mxu0 0
        %1714 = vmatpush.bf16.xpose.msra.mxu0 0
        %1715 = vmatpush.bf16.xpose.msra.mxu0 0
        %1716 = vmatpush.bf16.xpose.msra.mxu0 0
        %1717 = vmatpush.bf16.xpose.msra.mxu0 %v1708
        %1718 = vmatmul.bf16.gmra.mxu0 %v1702
        %v1719 = vpop.f32.mrf.mxu0
        %v1720 = vadd.f32 0.0, %v1719
        %v1721 = vpop.f32.mrf.mxu0
        %v1722 = vadd.f32 0.0, %v1721
        %1723 = vdwg.mxu0
        %v1726 = vunpack.c.l.b16 %v1572
        %v1727 = vunpack.c.l.b16 %v1573
        %v1728 = vpack.c.b16 %v1727, %v1726
        %v1732 = vunpack.c.l.b16 %v1588
        %v1733 = vunpack.c.l.b16 %v1589
        %v1734 = vpack.c.b16 %v1733, %v1732
        %1736 = vmatpush.bf16.xpose.msra.mxu0 0
        %1737 = vmatpush.bf16.xpose.msra.mxu0 0
        %1738 = vmatpush.bf16.xpose.msra.mxu0 0
        %1739 = vmatpush.bf16.xpose.msra.mxu0 0
        %1740 = vmatpush.bf16.xpose.msra.mxu0 0
        %1741 = vmatpush.bf16.xpose.msra.mxu0 0
        %1742 = vmatpush.bf16.xpose.msra.mxu0 0
        %1743 = vmatpush.bf16.xpose.msra.mxu0 %v1734
        %1744 = vmatmul.bf16.gmra.mxu0 %v1728
        %v1745 = vpop.f32.mrf.mxu0
        %v1746 = vadd.f32 0.0, %v1745
        %v1747 = vpop.f32.mrf.mxu0
        %v1748 = vadd.f32 0.0, %v1747
        %1749 = vdwg.mxu0
        %v1752 = vunpack.c.l.b16 %v1574
        %v1753 = vunpack.c.l.b16 %v1575
        %v1754 = vpack.c.b16 %v1753, %v1752
        %v1758 = vunpack.c.l.b16 %v1590
        %v1759 = vunpack.c.l.b16 %v1591
        %v1760 = vpack.c.b16 %v1759, %v1758
        %1762 = vmatpush.bf16.xpose.msra.mxu0 0
        %1763 = vmatpush.bf16.xpose.msra.mxu0 0
        %1764 = vmatpush.bf16.xpose.msra.mxu0 0
        %1765 = vmatpush.bf16.xpose.msra.mxu0 0
        %1766 = vmatpush.bf16.xpose.msra.mxu0 0
        %1767 = vmatpush.bf16.xpose.msra.mxu0 0
        %1768 = vmatpush.bf16.xpose.msra.mxu0 0
        %1769 = vmatpush.bf16.xpose.msra.mxu0 %v1760
        %1770 = vmatmul.bf16.gmra.mxu0 %v1754
        %v1771 = vpop.f32.mrf.mxu0
        %v1772 = vadd.f32 0.0, %v1771
        %v1773 = vpop.f32.mrf.mxu0
        %v1774 = vadd.f32 0.0, %v1773
        %1775 = vdwg.mxu0
        %v1778 = vunpack.c.l.b16 %v1576
        %v1779 = vunpack.c.l.b16 %v1577
        %v1780 = vpack.c.b16 %v1779, %v1778
        %v1784 = vunpack.c.l.b16 %v1592
        %v1785 = vunpack.c.l.b16 %v1593
        %v1786 = vpack.c.b16 %v1785, %v1784
        %1788 = vmatpush.bf16.xpose.msra.mxu0 0
        %1789 = vmatpush.bf16.xpose.msra.mxu0 0
        %1790 = vmatpush.bf16.xpose.msra.mxu0 0
        %1791 = vmatpush.bf16.xpose.msra.mxu0 0
        %1792 = vmatpush.bf16.xpose.msra.mxu0 0
        %1793 = vmatpush.bf16.xpose.msra.mxu0 0
        %1794 = vmatpush.bf16.xpose.msra.mxu0 0
        %1795 = vmatpush.bf16.xpose.msra.mxu0 %v1786
        %1796 = vmatmul.bf16.gmra.mxu0 %v1780
        %v1797 = vpop.f32.mrf.mxu0
        %v1798 = vadd.f32 0.0, %v1797
        %v1799 = vpop.f32.mrf.mxu0
        %v1800 = vadd.f32 0.0, %v1799
        %1801 = vdwg.mxu0
        %v1802 = vmul.f32 %v1616, 0.088388346
        %v1803 = vmul.f32 %v1618, 0.088388346
        %v1804 = vmul.f32 %v1642, 0.088388346
        %v1805 = vmul.f32 %v1644, 0.088388346
        %v1806 = vmul.f32 %v1668, 0.088388346
        %v1807 = vmul.f32 %v1670, 0.088388346
        %v1808 = vmul.f32 %v1694, 0.088388346
        %v1809 = vmul.f32 %v1696, 0.088388346
        %v1810 = vmul.f32 %v1720, 0.088388346
        %v1811 = vmul.f32 %v1722, 0.088388346
        %v1812 = vmul.f32 %v1746, 0.088388346
        %v1813 = vmul.f32 %v1748, 0.088388346
        %v1814 = vmul.f32 %v1772, 0.088388346
        %v1815 = vmul.f32 %v1774, 0.088388346
        %v1816 = vmul.f32 %v1798, 0.088388346
        %v1817 = vmul.f32 %v1800, 0.088388346
        %v1818 = vld [vmem:[#allocation15] sm:$0xff]
        %v1819 = vld [vmem:[#allocation15 + $0x8] sm:$0xff]
        %v1820 = vadd.f32 %v1802, %v1818
        %v1821 = vadd.f32 %v1803, %v1819
        %v1822 = vadd.f32 %v1804, %v1818
        %v1823 = vadd.f32 %v1805, %v1819
        %v1824 = vadd.f32 %v1806, %v1818
        %v1825 = vadd.f32 %v1807, %v1819
        %v1826 = vadd.f32 %v1808, %v1818
        %v1827 = vadd.f32 %v1809, %v1819
        %v1828 = vadd.f32 %v1810, %v1818
        %v1829 = vadd.f32 %v1811, %v1819
        %v1830 = vadd.f32 %v1812, %v1818
        %v1831 = vadd.f32 %v1813, %v1819
        %v1832 = vadd.f32 %v1814, %v1818
        %v1833 = vadd.f32 %v1815, %v1819
        %v1834 = vadd.f32 %v1816, %v1818
        %v1835 = vadd.f32 %v1817, %v1819
        %vm1836 = vcmask 130048
        %v1837 = vsel %vm1836, %v1820, -inf
        %1838 = vmax.xlane.f32.xlu0 %v1837
        %v1839 = vpop.xlane.xlu0 %1838
        %v1840 = vsel %vm1836, %v1821, -inf
        %1841 = vmax.xlane.f32.xlu0 %v1840
        %v1842 = vpop.xlane.xlu0 %1841
        %v1843 = vsel %vm1836, %v1822, -inf
        %1844 = vmax.xlane.f32.xlu0 %v1843
        %v1845 = vpop.xlane.xlu0 %1844
        %v1846 = vsel %vm1836, %v1823, -inf
        %1847 = vmax.xlane.f32.xlu0 %v1846
        %v1848 = vpop.xlane.xlu0 %1847
        %v1849 = vsel %vm1836, %v1824, -inf
        %1850 = vmax.xlane.f32.xlu0 %v1849
        %v1851 = vpop.xlane.xlu0 %1850
        %v1852 = vsel %vm1836, %v1825, -inf
        %1853 = vmax.xlane.f32.xlu0 %v1852
        %v1854 = vpop.xlane.xlu0 %1853
        %v1855 = vsel %vm1836, %v1826, -inf
        %1856 = vmax.xlane.f32.xlu0 %v1855
        %v1857 = vpop.xlane.xlu0 %1856
        %v1858 = vsel %vm1836, %v1827, -inf
        %1859 = vmax.xlane.f32.xlu0 %v1858
        %v1860 = vpop.xlane.xlu0 %1859
        %v1861 = vsel %vm1836, %v1828, -inf
        %1862 = vmax.xlane.f32.xlu0 %v1861
        %v1863 = vpop.xlane.xlu0 %1862
        %v1864 = vsel %vm1836, %v1829, -inf
        %1865 = vmax.xlane.f32.xlu0 %v1864
        %v1866 = vpop.xlane.xlu0 %1865
        %v1867 = vsel %vm1836, %v1830, -inf
        %1868 = vmax.xlane.f32.xlu0 %v1867
        %v1869 = vpop.xlane.xlu0 %1868
        %v1870 = vsel %vm1836, %v1831, -inf
        %1871 = vmax.xlane.f32.xlu0 %v1870
        %v1872 = vpop.xlane.xlu0 %1871
        %v1873 = vsel %vm1836, %v1832, -inf
        %1874 = vmax.xlane.f32.xlu0 %v1873
        %v1875 = vpop.xlane.xlu0 %1874
        %v1876 = vsel %vm1836, %v1833, -inf
        %1877 = vmax.xlane.f32.xlu0 %v1876
        %v1878 = vpop.xlane.xlu0 %1877
        %v1879 = vsel %vm1836, %v1834, -inf
        %1880 = vmax.xlane.f32.xlu0 %v1879
        %v1881 = vpop.xlane.xlu0 %1880
        %v1882 = vsel %vm1836, %v1835, -inf
        %1883 = vmax.xlane.f32.xlu0 %v1882
        %v1884 = vpop.xlane.xlu0 %1883
        %v1885 = vsub.f32 %v1820, %v1839
        %v1886 = vsub.f32 %v1821, %v1842
        %v1887 = vsub.f32 %v1822, %v1845
        %v1888 = vsub.f32 %v1823, %v1848
        %v1889 = vsub.f32 %v1824, %v1851
        %v1890 = vsub.f32 %v1825, %v1854
        %v1891 = vsub.f32 %v1826, %v1857
        %v1892 = vsub.f32 %v1827, %v1860
        %v1893 = vsub.f32 %v1828, %v1863
        %v1894 = vsub.f32 %v1829, %v1866
        %v1895 = vsub.f32 %v1830, %v1869
        %v1896 = vsub.f32 %v1831, %v1872
        %v1897 = vsub.f32 %v1832, %v1875
        %v1898 = vsub.f32 %v1833, %v1878
        %v1899 = vsub.f32 %v1834, %v1881
        %v1900 = vsub.f32 %v1835, %v1884
        %v1901 = vmul.f32 %v1885, 1.442695
        %v1902 = vpow.pop %v1901
        %v1903 = vmul.f32 %v1886, 1.442695
        %v1904 = vpow.pop %v1903
        %v1905 = vmul.f32 %v1887, 1.442695
        %v1906 = vpow.pop %v1905
        %v1907 = vmul.f32 %v1888, 1.442695
        %v1908 = vpow.pop %v1907
        %v1909 = vmul.f32 %v1889, 1.442695
        %v1910 = vpow.pop %v1909
        %v1911 = vmul.f32 %v1890, 1.442695
        %v1912 = vpow.pop %v1911
        %v1913 = vmul.f32 %v1891, 1.442695
        %v1914 = vpow.pop %v1913
        %v1915 = vmul.f32 %v1892, 1.442695
        %v1916 = vpow.pop %v1915
        %v1917 = vmul.f32 %v1893, 1.442695
        %v1918 = vpow.pop %v1917
        %v1919 = vmul.f32 %v1894, 1.442695
        %v1920 = vpow.pop %v1919
        %v1921 = vmul.f32 %v1895, 1.442695
        %v1922 = vpow.pop %v1921
        %v1923 = vmul.f32 %v1896, 1.442695
        %v1924 = vpow.pop %v1923
        %v1925 = vmul.f32 %v1897, 1.442695
        %v1926 = vpow.pop %v1925
        %v1927 = vmul.f32 %v1898, 1.442695
        %v1928 = vpow.pop %v1927
        %v1929 = vmul.f32 %v1899, 1.442695
        %v1930 = vpow.pop %v1929
        %v1931 = vmul.f32 %v1900, 1.442695
        %v1932 = vpow.pop %v1931
        %v1933 = vsel %vm1836, %v1902, 0.0
        %1934 = vadd.xlane.f32.xlu0 %v1933
        %v1935 = vpop.xlane.xlu0 %1934
        %v1936 = vsel %vm1836, %v1904, 0.0
        %1937 = vadd.xlane.f32.xlu0 %v1936
        %v1938 = vpop.xlane.xlu0 %1937
        %v1939 = vsel %vm1836, %v1906, 0.0
        %1940 = vadd.xlane.f32.xlu0 %v1939
        %v1941 = vpop.xlane.xlu0 %1940
        %v1942 = vsel %vm1836, %v1908, 0.0
        %1943 = vadd.xlane.f32.xlu0 %v1942
        %v1944 = vpop.xlane.xlu0 %1943
        %v1945 = vsel %vm1836, %v1910, 0.0
        %1946 = vadd.xlane.f32.xlu0 %v1945
        %v1947 = vpop.xlane.xlu0 %1946
        %v1948 = vsel %vm1836, %v1912, 0.0
        %1949 = vadd.xlane.f32.xlu0 %v1948
        %v1950 = vpop.xlane.xlu0 %1949
        %v1951 = vsel %vm1836, %v1914, 0.0
        %1952 = vadd.xlane.f32.xlu0 %v1951
        %v1953 = vpop.xlane.xlu0 %1952
        %v1954 = vsel %vm1836, %v1916, 0.0
        %1955 = vadd.xlane.f32.xlu0 %v1954
        %v1956 = vpop.xlane.xlu0 %1955
        %v1957 = vsel %vm1836, %v1918, 0.0
        %1958 = vadd.xlane.f32.xlu0 %v1957
        %v1959 = vpop.xlane.xlu0 %1958
        %v1960 = vsel %vm1836, %v1920, 0.0
        %1961 = vadd.xlane.f32.xlu0 %v1960
        %v1962 = vpop.xlane.xlu0 %1961
        %v1963 = vsel %vm1836, %v1922, 0.0
        %1964 = vadd.xlane.f32.xlu0 %v1963
        %v1965 = vpop.xlane.xlu0 %1964
        %v1966 = vsel %vm1836, %v1924, 0.0
        %1967 = vadd.xlane.f32.xlu0 %v1966
        %v1968 = vpop.xlane.xlu0 %1967
        %v1969 = vsel %vm1836, %v1926, 0.0
        %1970 = vadd.xlane.f32.xlu0 %v1969
        %v1971 = vpop.xlane.xlu0 %1970
        %v1972 = vsel %vm1836, %v1928, 0.0
        %1973 = vadd.xlane.f32.xlu0 %v1972
        %v1974 = vpop.xlane.xlu0 %1973
        %v1975 = vsel %vm1836, %v1930, 0.0
        %1976 = vadd.xlane.f32.xlu0 %v1975
        %v1977 = vpop.xlane.xlu0 %1976
        %v1978 = vsel %vm1836, %v1932, 0.0
        %1979 = vadd.xlane.f32.xlu0 %v1978
        %v1980 = vpop.xlane.xlu0 %1979
        %v1981 = vrcp.pop %v1935
        %v1982 = vrcp.pop %v1938
        %v1983 = vrcp.pop %v1941
        %v1984 = vrcp.pop %v1944
        %v1985 = vrcp.pop %v1947
        %v1986 = vrcp.pop %v1950
        %v1987 = vrcp.pop %v1953
        %v1988 = vrcp.pop %v1956
        %v1989 = vrcp.pop %v1959
        %v1990 = vrcp.pop %v1962
        %v1991 = vrcp.pop %v1965
        %v1992 = vrcp.pop %v1968
        %v1993 = vrcp.pop %v1971
        %v1994 = vrcp.pop %v1974
        %v1995 = vrcp.pop %v1977
        %v1996 = vrcp.pop %v1980
        %v1997 = vmul.f32 %v1902, %v1981
        %v1998 = vmul.f32 %v1904, %v1982
        %v1999 = vmul.f32 %v1906, %v1983
        %v2000 = vmul.f32 %v1908, %v1984
        %v2001 = vmul.f32 %v1910, %v1985
        %v2002 = vmul.f32 %v1912, %v1986
        %v2003 = vmul.f32 %v1914, %v1987
        %v2004 = vmul.f32 %v1916, %v1988
        %v2005 = vmul.f32 %v1918, %v1989
        %v2006 = vmul.f32 %v1920, %v1990
        %v2007 = vmul.f32 %v1922, %v1991
        %v2008 = vmul.f32 %v1924, %v1992
        %v2009 = vmul.f32 %v1926, %v1993
        %v2010 = vmul.f32 %v1928, %v1994
        %v2011 = vmul.f32 %v1930, %v1995
        %v2012 = vmul.f32 %v1932, %v1996
        %v2013 = vpack.c.bf16 %v1997, %v1997
        %v2014 = vpack.c.bf16 %v1998, %v1998
        %v2015 = vpack.c.bf16 %v1999, %v1999
        %v2016 = vpack.c.bf16 %v2000, %v2000
        %v2017 = vpack.c.bf16 %v2001, %v2001
        %v2018 = vpack.c.bf16 %v2002, %v2002
        %v2019 = vpack.c.bf16 %v2003, %v2003
        %v2020 = vpack.c.bf16 %v2004, %v2004
        %v2021 = vpack.c.bf16 %v2005, %v2005
        %v2022 = vpack.c.bf16 %v2006, %v2006
        %v2023 = vpack.c.bf16 %v2007, %v2007
        %v2024 = vpack.c.bf16 %v2008, %v2008
        %v2025 = vpack.c.bf16 %v2009, %v2009
        %v2026 = vpack.c.bf16 %v2010, %v2010
        %v2027 = vpack.c.bf16 %v2011, %v2011
        %v2028 = vpack.c.bf16 %v2012, %v2012
        %v2029 = vld [vmem:[#allocation5] sm:$0xf]
        %v2030 = vld [vmem:[#allocation5 + $0x4] sm:$0xf]
        %v2031 = vld [vmem:[#allocation5 + $0x8] sm:$0xf]
        %v2032 = vld [vmem:[#allocation5 + $0xc] sm:$0xf]
        %v2033 = vld [vmem:[#allocation5 + $0x10] sm:$0xf]
        %v2034 = vld [vmem:[#allocation5 + $0x14] sm:$0xf]
        %v2035 = vld [vmem:[#allocation5 + $0x18] sm:$0xf]
        %v2036 = vld [vmem:[#allocation5 + $0x1c] sm:$0xf]
        %v2037 = vld [vmem:[#allocation5 + $0x20] sm:$0xf]
        %v2038 = vld [vmem:[#allocation5 + $0x24] sm:$0xf]
        %v2039 = vld [vmem:[#allocation5 + $0x28] sm:$0xf]
        %v2040 = vld [vmem:[#allocation5 + $0x2c] sm:$0xf]
        %v2041 = vld [vmem:[#allocation5 + $0x30] sm:$0xf]
        %v2042 = vld [vmem:[#allocation5 + $0x34] sm:$0xf]
        %v2043 = vld [vmem:[#allocation5 + $0x38] sm:$0xf]
        %v2044 = vld [vmem:[#allocation5 + $0x3c] sm:$0xf]
        %v2047 = vunpack.c.l.b16 %v2013
        %v2048 = vunpack.c.l.b16 %v2014
        %v2049 = vpack.c.b16 %v2048, %v2047
        %v2052 = vunpack.c.l.b16 %v2029
        %v2053 = vunpack.c.l.b16 %v2030
        %v2054 = vpack.c.b16 %v2053, %v2052
        %v2057 = vsel %vm1836, %v2049, 0
        %2059 = vmatpush.bf16.msra.mxu0 0
        %2060 = vmatpush.bf16.msra.mxu0 0
        %2061 = vmatpush.bf16.msra.mxu0 0
        %2062 = vmatpush.bf16.msra.mxu0 0
        %2063 = vmatpush.bf16.msra.mxu0 0
        %2064 = vmatpush.bf16.msra.mxu0 0
        %2065 = vmatpush.bf16.msra.mxu0 0
        %2066 = vmatpush.bf16.msra.mxu0 %v2054
        %2067 = vmatmul.bf16.gmra.mxu0 %v2057
        %v2068 = vpop.f32.mrf.mxu0
        %v2069 = vadd.f32 0.0, %v2068
        %v2070 = vpop.f32.mrf.mxu0
        %v2071 = vadd.f32 0.0, %v2070
        %2072 = vdwg.mxu0
        %v2075 = vunpack.c.l.b16 %v2015
        %v2076 = vunpack.c.l.b16 %v2016
        %v2077 = vpack.c.b16 %v2076, %v2075
        %v2080 = vunpack.c.l.b16 %v2031
        %v2081 = vunpack.c.l.b16 %v2032
        %v2082 = vpack.c.b16 %v2081, %v2080
        %v2085 = vsel %vm1836, %v2077, 0
        %2087 = vmatpush.bf16.msra.mxu0 0
        %2088 = vmatpush.bf16.msra.mxu0 0
        %2089 = vmatpush.bf16.msra.mxu0 0
        %2090 = vmatpush.bf16.msra.mxu0 0
        %2091 = vmatpush.bf16.msra.mxu0 0
        %2092 = vmatpush.bf16.msra.mxu0 0
        %2093 = vmatpush.bf16.msra.mxu0 0
        %2094 = vmatpush.bf16.msra.mxu0 %v2082
        %2095 = vmatmul.bf16.gmra.mxu0 %v2085
        %v2096 = vpop.f32.mrf.mxu0
        %v2097 = vadd.f32 0.0, %v2096
        %v2098 = vpop.f32.mrf.mxu0
        %v2099 = vadd.f32 0.0, %v2098
        %2100 = vdwg.mxu0
        %v2103 = vunpack.c.l.b16 %v2017
        %v2104 = vunpack.c.l.b16 %v2018
        %v2105 = vpack.c.b16 %v2104, %v2103
        %v2108 = vunpack.c.l.b16 %v2033
        %v2109 = vunpack.c.l.b16 %v2034
        %v2110 = vpack.c.b16 %v2109, %v2108
        %v2113 = vsel %vm1836, %v2105, 0
        %2115 = vmatpush.bf16.msra.mxu0 0
        %2116 = vmatpush.bf16.msra.mxu0 0
        %2117 = vmatpush.bf16.msra.mxu0 0
        %2118 = vmatpush.bf16.msra.mxu0 0
        %2119 = vmatpush.bf16.msra.mxu0 0
        %2120 = vmatpush.bf16.msra.mxu0 0
        %2121 = vmatpush.bf16.msra.mxu0 0
        %2122 = vmatpush.bf16.msra.mxu0 %v2110
        %2123 = vmatmul.bf16.gmra.mxu0 %v2113
        %v2124 = vpop.f32.mrf.mxu0
        %v2125 = vadd.f32 0.0, %v2124
        %v2126 = vpop.f32.mrf.mxu0
        %v2127 = vadd.f32 0.0, %v2126
        %2128 = vdwg.mxu0
        %v2131 = vunpack.c.l.b16 %v2019
        %v2132 = vunpack.c.l.b16 %v2020
        %v2133 = vpack.c.b16 %v2132, %v2131
        %v2136 = vunpack.c.l.b16 %v2035
        %v2137 = vunpack.c.l.b16 %v2036
        %v2138 = vpack.c.b16 %v2137, %v2136
        %v2141 = vsel %vm1836, %v2133, 0
        %2143 = vmatpush.bf16.msra.mxu0 0
        %2144 = vmatpush.bf16.msra.mxu0 0
        %2145 = vmatpush.bf16.msra.mxu0 0
        %2146 = vmatpush.bf16.msra.mxu0 0
        %2147 = vmatpush.bf16.msra.mxu0 0
        %2148 = vmatpush.bf16.msra.mxu0 0
        %2149 = vmatpush.bf16.msra.mxu0 0
        %2150 = vmatpush.bf16.msra.mxu0 %v2138
        %2151 = vmatmul.bf16.gmra.mxu0 %v2141
        %v2152 = vpop.f32.mrf.mxu0
        %v2153 = vadd.f32 0.0, %v2152
        %v2154 = vpop.f32.mrf.mxu0
        %v2155 = vadd.f32 0.0, %v2154
        %2156 = vdwg.mxu0
        %v2159 = vunpack.c.l.b16 %v2021
        %v2160 = vunpack.c.l.b16 %v2022
        %v2161 = vpack.c.b16 %v2160, %v2159
        %v2164 = vunpack.c.l.b16 %v2037
        %v2165 = vunpack.c.l.b16 %v2038
        %v2166 = vpack.c.b16 %v2165, %v2164
        %v2169 = vsel %vm1836, %v2161, 0
        %2171 = vmatpush.bf16.msra.mxu0 0
        %2172 = vmatpush.bf16.msra.mxu0 0
        %2173 = vmatpush.bf16.msra.mxu0 0
        %2174 = vmatpush.bf16.msra.mxu0 0
        %2175 = vmatpush.bf16.msra.mxu0 0
        %2176 = vmatpush.bf16.msra.mxu0 0
        %2177 = vmatpush.bf16.msra.mxu0 0
        %2178 = vmatpush.bf16.msra.mxu0 %v2166
        %2179 = vmatmul.bf16.gmra.mxu0 %v2169
        %v2180 = vpop.f32.mrf.mxu0
        %v2181 = vadd.f32 0.0, %v2180
        %v2182 = vpop.f32.mrf.mxu0
        %v2183 = vadd.f32 0.0, %v2182
        %2184 = vdwg.mxu0
        %v2187 = vunpack.c.l.b16 %v2023
        %v2188 = vunpack.c.l.b16 %v2024
        %v2189 = vpack.c.b16 %v2188, %v2187
        %v2192 = vunpack.c.l.b16 %v2039
        %v2193 = vunpack.c.l.b16 %v2040
        %v2194 = vpack.c.b16 %v2193, %v2192
        %v2197 = vsel %vm1836, %v2189, 0
        %2199 = vmatpush.bf16.msra.mxu0 0
        %2200 = vmatpush.bf16.msra.mxu0 0
        %2201 = vmatpush.bf16.msra.mxu0 0
        %2202 = vmatpush.bf16.msra.mxu0 0
        %2203 = vmatpush.bf16.msra.mxu0 0
        %2204 = vmatpush.bf16.msra.mxu0 0
        %2205 = vmatpush.bf16.msra.mxu0 0
        %2206 = vmatpush.bf16.msra.mxu0 %v2194
        %2207 = vmatmul.bf16.gmra.mxu0 %v2197
        %v2208 = vpop.f32.mrf.mxu0
        %v2209 = vadd.f32 0.0, %v2208
        %v2210 = vpop.f32.mrf.mxu0
        %v2211 = vadd.f32 0.0, %v2210
        %2212 = vdwg.mxu0
        %v2215 = vunpack.c.l.b16 %v2025
        %v2216 = vunpack.c.l.b16 %v2026
        %v2217 = vpack.c.b16 %v2216, %v2215
        %v2220 = vunpack.c.l.b16 %v2041
        %v2221 = vunpack.c.l.b16 %v2042
        %v2222 = vpack.c.b16 %v2221, %v2220
        %v2225 = vsel %vm1836, %v2217, 0
        %2227 = vmatpush.bf16.msra.mxu0 0
        %2228 = vmatpush.bf16.msra.mxu0 0
        %2229 = vmatpush.bf16.msra.mxu0 0
        %2230 = vmatpush.bf16.msra.mxu0 0
        %2231 = vmatpush.bf16.msra.mxu0 0
        %2232 = vmatpush.bf16.msra.mxu0 0
        %2233 = vmatpush.bf16.msra.mxu0 0
        %2234 = vmatpush.bf16.msra.mxu0 %v2222
        %2235 = vmatmul.bf16.gmra.mxu0 %v2225
        %v2236 = vpop.f32.mrf.mxu0
        %v2237 = vadd.f32 0.0, %v2236
        %v2238 = vpop.f32.mrf.mxu0
        %v2239 = vadd.f32 0.0, %v2238
        %2240 = vdwg.mxu0
        %v2243 = vunpack.c.l.b16 %v2027
        %v2244 = vunpack.c.l.b16 %v2028
        %v2245 = vpack.c.b16 %v2244, %v2243
        %v2248 = vunpack.c.l.b16 %v2043
        %v2249 = vunpack.c.l.b16 %v2044
        %v2250 = vpack.c.b16 %v2249, %v2248
        %v2253 = vsel %vm1836, %v2245, 0
        %2255 = vmatpush.bf16.msra.mxu0 0
        %2256 = vmatpush.bf16.msra.mxu0 0
        %2257 = vmatpush.bf16.msra.mxu0 0
        %2258 = vmatpush.bf16.msra.mxu0 0
        %2259 = vmatpush.bf16.msra.mxu0 0
        %2260 = vmatpush.bf16.msra.mxu0 0
        %2261 = vmatpush.bf16.msra.mxu0 0
        %2262 = vmatpush.bf16.msra.mxu0 %v2250
        %2263 = vmatmul.bf16.gmra.mxu0 %v2253
        %v2264 = vpop.f32.mrf.mxu0
        %v2265 = vadd.f32 0.0, %v2264
        %v2266 = vpop.f32.mrf.mxu0
        %v2267 = vadd.f32 0.0, %v2266
        %2268 = vdwg.mxu0
        %v2269 = vpack.c.bf16 %v2069, %v2069
        %v2270 = vpack.c.bf16 %v2071, %v2071
        %v2271 = vpack.c.bf16 %v2097, %v2097
        %v2272 = vpack.c.bf16 %v2099, %v2099
        %2273 = vst [vmem:[#allocation6] sm:$0xf] %v2269
        %2274 = vst [vmem:[#allocation6 + $0x10] sm:$0xf] %v2270
        %2275 = vst [vmem:[#allocation6 + $0x20] sm:$0xf] %v2271
        %2276 = vst [vmem:[#allocation6 + $0x30] sm:$0xf] %v2272
        %v2277 = vpack.c.bf16 %v2125, %v2125
        %v2278 = vpack.c.bf16 %v2127, %v2127
        %v2279 = vpack.c.bf16 %v2153, %v2153
        %v2280 = vpack.c.bf16 %v2155, %v2155
        %2281 = vst [vmem:[#allocation6 + $0x4] sm:$0xf] %v2277
        %2282 = vst [vmem:[#allocation6 + $0x14] sm:$0xf] %v2278
        %2283 = vst [vmem:[#allocation6 + $0x24] sm:$0xf] %v2279
        %2284 = vst [vmem:[#allocation6 + $0x34] sm:$0xf] %v2280
        %v2285 = vpack.c.bf16 %v2181, %v2181
        %v2286 = vpack.c.bf16 %v2183, %v2183
        %v2287 = vpack.c.bf16 %v2209, %v2209
        %v2288 = vpack.c.bf16 %v2211, %v2211
        %2289 = vst [vmem:[#allocation6 + $0x8] sm:$0xf] %v2285
        %2290 = vst [vmem:[#allocation6 + $0x18] sm:$0xf] %v2286
        %2291 = vst [vmem:[#allocation6 + $0x28] sm:$0xf] %v2287
        %2292 = vst [vmem:[#allocation6 + $0x38] sm:$0xf] %v2288
        %v2293 = vpack.c.bf16 %v2237, %v2237
        %v2294 = vpack.c.bf16 %v2239, %v2239
        %v2295 = vpack.c.bf16 %v2265, %v2265
        %v2296 = vpack.c.bf16 %v2267, %v2267
        %2297 = vst [vmem:[#allocation6 + $0xc] sm:$0xf] %v2293
        %2298 = vst [vmem:[#allocation6 + $0x1c] sm:$0xf] %v2294
        %2299 = vst [vmem:[#allocation6 + $0x2c] sm:$0xf] %v2295
        %2300 = vst [vmem:[#allocation6 + $0x3c] sm:$0xf] %v2296
        %v2301 = vld [vmem:[#allocation6] sm:$0xff]
        %v2302 = vld [vmem:[#allocation6 + $0x8] sm:$0xff]
        %v2303 = vld [vmem:[#allocation6 + $0x10] sm:$0xff]
        %v2304 = vld [vmem:[#allocation6 + $0x18] sm:$0xff]
        %v2305 = vld [vmem:[#allocation6 + $0x20] sm:$0xff]
        %v2306 = vld [vmem:[#allocation6 + $0x28] sm:$0xff]
        %v2307 = vld [vmem:[#allocation6 + $0x30] sm:$0xff]
        %v2308 = vld [vmem:[#allocation6 + $0x38] sm:$0xff]
        %v2309 = vld [vmem:[%s345] sm:$0xf]
        %v2310 = vld [vmem:[%s345 + $0x4] sm:$0xf]
        %v2311 = vld [vmem:[%s345 + $0x8] sm:$0xf]
        %v2312 = vld [vmem:[%s345 + $0xc] sm:$0xf]
        %v2313 = vld [vmem:[%s345 + $0x10] sm:$0xf]
        %v2314 = vld [vmem:[%s345 + $0x14] sm:$0xf]
        %v2315 = vld [vmem:[%s345 + $0x18] sm:$0xf]
        %v2316 = vld [vmem:[%s345 + $0x1c] sm:$0xf]
        %v2317 = vld [vmem:[%s345 + $0x20] sm:$0xf]
        %v2318 = vld [vmem:[%s345 + $0x24] sm:$0xf]
        %v2319 = vld [vmem:[%s345 + $0x28] sm:$0xf]
        %v2320 = vld [vmem:[%s345 + $0x2c] sm:$0xf]
        %v2321 = vld [vmem:[%s345 + $0x30] sm:$0xf]
        %v2322 = vld [vmem:[%s345 + $0x34] sm:$0xf]
        %v2323 = vld [vmem:[%s345 + $0x38] sm:$0xf]
        %v2324 = vld [vmem:[%s345 + $0x3c] sm:$0xf]
        %v2325 = vld [vmem:[%s345 + $0x40] sm:$0xf]
        %v2326 = vld [vmem:[%s345 + $0x44] sm:$0xf]
        %v2327 = vld [vmem:[%s345 + $0x48] sm:$0xf]
        %v2328 = vld [vmem:[%s345 + $0x4c] sm:$0xf]
        %v2329 = vld [vmem:[%s345 + $0x50] sm:$0xf]
        %v2330 = vld [vmem:[%s345 + $0x54] sm:$0xf]
        %v2331 = vld [vmem:[%s345 + $0x58] sm:$0xf]
        %v2332 = vld [vmem:[%s345 + $0x5c] sm:$0xf]
        %v2333 = vld [vmem:[%s345 + $0x60] sm:$0xf]
        %v2334 = vld [vmem:[%s345 + $0x64] sm:$0xf]
        %v2335 = vld [vmem:[%s345 + $0x68] sm:$0xf]
        %v2336 = vld [vmem:[%s345 + $0x6c] sm:$0xf]
        %v2337 = vld [vmem:[%s345 + $0x70] sm:$0xf]
        %v2338 = vld [vmem:[%s345 + $0x74] sm:$0xf]
        %v2339 = vld [vmem:[%s345 + $0x78] sm:$0xf]
        %v2340 = vld [vmem:[%s345 + $0x7c] sm:$0xf]
        %v2341 = vld [vmem:[%s345 + $0x80] sm:$0xf]
        %v2342 = vld [vmem:[%s345 + $0x84] sm:$0xf]
        %v2343 = vld [vmem:[%s345 + $0x88] sm:$0xf]
        %v2344 = vld [vmem:[%s345 + $0x8c] sm:$0xf]
        %v2345 = vld [vmem:[%s345 + $0x90] sm:$0xf]
        %v2346 = vld [vmem:[%s345 + $0x94] sm:$0xf]
        %v2347 = vld [vmem:[%s345 + $0x98] sm:$0xf]
        %v2348 = vld [vmem:[%s345 + $0x9c] sm:$0xf]
        %v2349 = vld [vmem:[%s345 + $0xa0] sm:$0xf]
        %v2350 = vld [vmem:[%s345 + $0xa4] sm:$0xf]
        %v2351 = vld [vmem:[%s345 + $0xa8] sm:$0xf]
        %v2352 = vld [vmem:[%s345 + $0xac] sm:$0xf]
        %v2353 = vld [vmem:[%s345 + $0xb0] sm:$0xf]
        %v2354 = vld [vmem:[%s345 + $0xb4] sm:$0xf]
        %v2355 = vld [vmem:[%s345 + $0xb8] sm:$0xf]
        %v2356 = vld [vmem:[%s345 + $0xbc] sm:$0xf]
        %v2357 = vld [vmem:[%s345 + $0xc0] sm:$0xf]
        %v2358 = vld [vmem:[%s345 + $0xc4] sm:$0xf]
        %v2359 = vld [vmem:[%s345 + $0xc8] sm:$0xf]
        %v2360 = vld [vmem:[%s345 + $0xcc] sm:$0xf]
        %v2361 = vld [vmem:[%s345 + $0xd0] sm:$0xf]
        %v2362 = vld [vmem:[%s345 + $0xd4] sm:$0xf]
        %v2363 = vld [vmem:[%s345 + $0xd8] sm:$0xf]
        %v2364 = vld [vmem:[%s345 + $0xdc] sm:$0xf]
        %v2365 = vld [vmem:[%s345 + $0xe0] sm:$0xf]
        %v2366 = vld [vmem:[%s345 + $0xe4] sm:$0xf]
        %v2367 = vld [vmem:[%s345 + $0xe8] sm:$0xf]
        %v2368 = vld [vmem:[%s345 + $0xec] sm:$0xf]
        %v2369 = vld [vmem:[%s345 + $0xf0] sm:$0xf]
        %v2370 = vld [vmem:[%s345 + $0xf4] sm:$0xf]
        %v2371 = vld [vmem:[%s345 + $0xf8] sm:$0xf]
        %v2372 = vld [vmem:[%s345 + $0xfc] sm:$0xf]
        %v2381 = vunpack.c.l.b16 %v2301
        %v2382 = vunpack.c.h.b16 %v2301
        %v2383 = vunpack.c.l.b16 %v2302
        %v2384 = vunpack.c.h.b16 %v2302
        %v2385 = vunpack.c.l.b16 %v2303
        %v2386 = vunpack.c.h.b16 %v2303
        %v2387 = vunpack.c.l.b16 %v2304
        %v2388 = vunpack.c.h.b16 %v2304
        %v2389 = vunpack.c.l.b16 %v2305
        %v2390 = vunpack.c.h.b16 %v2305
        %v2391 = vunpack.c.l.b16 %v2306
        %v2392 = vunpack.c.h.b16 %v2306
        %v2393 = vunpack.c.l.b16 %v2307
        %v2394 = vunpack.c.h.b16 %v2307
        %v2395 = vunpack.c.l.b16 %v2308
        %v2396 = vunpack.c.h.b16 %v2308
        %v2397 = vpack.c.b16 %v2385, %v2381
        %v2398 = vpack.c.b16 %v2386, %v2382
        %v2399 = vpack.c.b16 %v2387, %v2383
        %v2400 = vpack.c.b16 %v2388, %v2384
        %v2401 = vpack.c.b16 %v2393, %v2389
        %v2402 = vpack.c.b16 %v2394, %v2390
        %v2403 = vpack.c.b16 %v2395, %v2391
        %v2404 = vpack.c.b16 %v2396, %v2392
        %v2477 = vunpack.c.l.b16 %v2309
        %v2478 = vunpack.c.l.b16 %v2310
        %v2479 = vunpack.c.l.b16 %v2311
        %v2480 = vunpack.c.l.b16 %v2312
        %v2481 = vunpack.c.l.b16 %v2313
        %v2482 = vunpack.c.l.b16 %v2314
        %v2483 = vunpack.c.l.b16 %v2315
        %v2484 = vunpack.c.l.b16 %v2316
        %v2485 = vunpack.c.l.b16 %v2317
        %v2486 = vunpack.c.l.b16 %v2318
        %v2487 = vunpack.c.l.b16 %v2319
        %v2488 = vunpack.c.l.b16 %v2320
        %v2489 = vunpack.c.l.b16 %v2321
        %v2490 = vunpack.c.l.b16 %v2322
        %v2491 = vunpack.c.l.b16 %v2323
        %v2492 = vunpack.c.l.b16 %v2324
        %v2493 = vunpack.c.l.b16 %v2325
        %v2494 = vunpack.c.l.b16 %v2326
        %v2495 = vunpack.c.l.b16 %v2327
        %v2496 = vunpack.c.l.b16 %v2328
        %v2497 = vunpack.c.l.b16 %v2329
        %v2498 = vunpack.c.l.b16 %v2330
        %v2499 = vunpack.c.l.b16 %v2331
        %v2500 = vunpack.c.l.b16 %v2332
        %v2501 = vunpack.c.l.b16 %v2333
        %v2502 = vunpack.c.l.b16 %v2334
        %v2503 = vunpack.c.l.b16 %v2335
        %v2504 = vunpack.c.l.b16 %v2336
        %v2505 = vunpack.c.l.b16 %v2337
        %v2506 = vunpack.c.l.b16 %v2338
        %v2507 = vunpack.c.l.b16 %v2339
        %v2508 = vunpack.c.l.b16 %v2340
        %v2509 = vunpack.c.l.b16 %v2341
        %v2510 = vunpack.c.l.b16 %v2342
        %v2511 = vunpack.c.l.b16 %v2343
        %v2512 = vunpack.c.l.b16 %v2344
        %v2513 = vunpack.c.l.b16 %v2345
        %v2514 = vunpack.c.l.b16 %v2346
        %v2515 = vunpack.c.l.b16 %v2347
        %v2516 = vunpack.c.l.b16 %v2348
        %v2517 = vunpack.c.l.b16 %v2349
        %v2518 = vunpack.c.l.b16 %v2350
        %v2519 = vunpack.c.l.b16 %v2351
        %v2520 = vunpack.c.l.b16 %v2352
        %v2521 = vunpack.c.l.b16 %v2353
        %v2522 = vunpack.c.l.b16 %v2354
        %v2523 = vunpack.c.l.b16 %v2355
        %v2524 = vunpack.c.l.b16 %v2356
        %v2525 = vunpack.c.l.b16 %v2357
        %v2526 = vunpack.c.l.b16 %v2358
        %v2527 = vunpack.c.l.b16 %v2359
        %v2528 = vunpack.c.l.b16 %v2360
        %v2529 = vunpack.c.l.b16 %v2361
        %v2530 = vunpack.c.l.b16 %v2362
        %v2531 = vunpack.c.l.b16 %v2363
        %v2532 = vunpack.c.l.b16 %v2364
        %v2533 = vunpack.c.l.b16 %v2365
        %v2534 = vunpack.c.l.b16 %v2366
        %v2535 = vunpack.c.l.b16 %v2367
        %v2536 = vunpack.c.l.b16 %v2368
        %v2537 = vunpack.c.l.b16 %v2369
        %v2538 = vunpack.c.l.b16 %v2370
        %v2539 = vunpack.c.l.b16 %v2371
        %v2540 = vunpack.c.l.b16 %v2372
        %v2541 = vpack.c.b16 %v2478, %v2477
        %v2542 = vpack.c.b16 %v2480, %v2479
        %v2543 = vpack.c.b16 %v2482, %v2481
        %v2544 = vpack.c.b16 %v2484, %v2483
        %v2545 = vpack.c.b16 %v2486, %v2485
        %v2546 = vpack.c.b16 %v2488, %v2487
        %v2547 = vpack.c.b16 %v2490, %v2489
        %v2548 = vpack.c.b16 %v2492, %v2491
        %v2549 = vpack.c.b16 %v2494, %v2493
        %v2550 = vpack.c.b16 %v2496, %v2495
        %v2551 = vpack.c.b16 %v2498, %v2497
        %v2552 = vpack.c.b16 %v2500, %v2499
        %v2553 = vpack.c.b16 %v2502, %v2501
        %v2554 = vpack.c.b16 %v2504, %v2503
        %v2555 = vpack.c.b16 %v2506, %v2505
        %v2556 = vpack.c.b16 %v2508, %v2507
        %v2557 = vpack.c.b16 %v2510, %v2509
        %v2558 = vpack.c.b16 %v2512, %v2511
        %v2559 = vpack.c.b16 %v2514, %v2513
        %v2560 = vpack.c.b16 %v2516, %v2515
        %v2561 = vpack.c.b16 %v2518, %v2517
        %v2562 = vpack.c.b16 %v2520, %v2519
        %v2563 = vpack.c.b16 %v2522, %v2521
        %v2564 = vpack.c.b16 %v2524, %v2523
        %v2565 = vpack.c.b16 %v2526, %v2525
        %v2566 = vpack.c.b16 %v2528, %v2527
        %v2567 = vpack.c.b16 %v2530, %v2529
        %v2568 = vpack.c.b16 %v2532, %v2531
        %v2569 = vpack.c.b16 %v2534, %v2533
        %v2570 = vpack.c.b16 %v2536, %v2535
        %v2571 = vpack.c.b16 %v2538, %v2537
        %v2572 = vpack.c.b16 %v2540, %v2539
        %2605 = vmatpush.bf16.msra.mxu0 %v2548
        %2606 = vmatpush.bf16.msra.mxu0 %v2547
        %2607 = vmatpush.bf16.msra.mxu0 %v2546
        %2608 = vmatpush.bf16.msra.mxu0 %v2545
        %2609 = vmatpush.bf16.msra.mxu0 %v2544
        %2610 = vmatpush.bf16.msra.mxu0 %v2543
        %2611 = vmatpush.bf16.msra.mxu0 %v2542
        %2612 = vmatpush.bf16.msra.mxu0 %v2541
        %2613 = vmatmul.bf16.gmra.mxu0 %v2397
        %v2614 = vpop.f32.mrf.mxu0
        %v2615 = vadd.f32 0.0, %v2614
        %v2616 = vpop.f32.mrf.mxu0
        %v2617 = vadd.f32 0.0, %v2616
        %2618 = vmatmul.bf16.gmra.mxu0 %v2401
        %v2619 = vpop.f32.mrf.mxu0
        %v2620 = vadd.f32 0.0, %v2619
        %v2621 = vpop.f32.mrf.mxu0
        %v2622 = vadd.f32 0.0, %v2621
        %2623 = vdwg.mxu0
        %2624 = vmatpush.bf16.msra.mxu0 %v2556
        %2625 = vmatpush.bf16.msra.mxu0 %v2555
        %2626 = vmatpush.bf16.msra.mxu0 %v2554
        %2627 = vmatpush.bf16.msra.mxu0 %v2553
        %2628 = vmatpush.bf16.msra.mxu0 %v2552
        %2629 = vmatpush.bf16.msra.mxu0 %v2551
        %2630 = vmatpush.bf16.msra.mxu0 %v2550
        %2631 = vmatpush.bf16.msra.mxu0 %v2549
        %2632 = vmatmul.bf16.gmra.mxu0 %v2398
        %v2633 = vpop.f32.mrf.mxu0
        %v2634 = vadd.f32 %v2615, %v2633
        %v2635 = vpop.f32.mrf.mxu0
        %v2636 = vadd.f32 %v2617, %v2635
        %2637 = vmatmul.bf16.gmra.mxu0 %v2402
        %v2638 = vpop.f32.mrf.mxu0
        %v2639 = vadd.f32 %v2620, %v2638
        %v2640 = vpop.f32.mrf.mxu0
        %v2641 = vadd.f32 %v2622, %v2640
        %2642 = vdwg.mxu0
        %2643 = vmatpush.bf16.msra.mxu0 %v2564
        %2644 = vmatpush.bf16.msra.mxu0 %v2563
        %2645 = vmatpush.bf16.msra.mxu0 %v2562
        %2646 = vmatpush.bf16.msra.mxu0 %v2561
        %2647 = vmatpush.bf16.msra.mxu0 %v2560
        %2648 = vmatpush.bf16.msra.mxu0 %v2559
        %2649 = vmatpush.bf16.msra.mxu0 %v2558
        %2650 = vmatpush.bf16.msra.mxu0 %v2557
        %2651 = vmatmul.bf16.gmra.mxu0 %v2399
        %v2652 = vpop.f32.mrf.mxu0
        %v2653 = vadd.f32 %v2634, %v2652
        %v2654 = vpop.f32.mrf.mxu0
        %v2655 = vadd.f32 %v2636, %v2654
        %2656 = vmatmul.bf16.gmra.mxu0 %v2403
        %v2657 = vpop.f32.mrf.mxu0
        %v2658 = vadd.f32 %v2639, %v2657
        %v2659 = vpop.f32.mrf.mxu0
        %v2660 = vadd.f32 %v2641, %v2659
        %2661 = vdwg.mxu0
        %2662 = vmatpush.bf16.msra.mxu0 %v2572
        %2663 = vmatpush.bf16.msra.mxu0 %v2571
        %2664 = vmatpush.bf16.msra.mxu0 %v2570
        %2665 = vmatpush.bf16.msra.mxu0 %v2569
        %2666 = vmatpush.bf16.msra.mxu0 %v2568
        %2667 = vmatpush.bf16.msra.mxu0 %v2567
        %2668 = vmatpush.bf16.msra.mxu0 %v2566
        %2669 = vmatpush.bf16.msra.mxu0 %v2565
        %2670 = vmatmul.bf16.gmra.mxu0 %v2400
        %v2671 = vpop.f32.mrf.mxu0
        %v2672 = vadd.f32 %v2653, %v2671
        %v2673 = vpop.f32.mrf.mxu0
        %v2674 = vadd.f32 %v2655, %v2673
        %2675 = vmatmul.bf16.gmra.mxu0 %v2404
        %v2676 = vpop.f32.mrf.mxu0
        %v2677 = vadd.f32 %v2658, %v2676
        %v2678 = vpop.f32.mrf.mxu0
        %v2679 = vadd.f32 %v2660, %v2678
        %2680 = vdwg.mxu0
        %2681 = vst [vmem:[%s379] sm:$0xff] %v2672
        %2682 = vst [vmem:[%s379 + $0x8] sm:$0xff] %v2674
        %2683 = vst [vmem:[%s379 + $0x10] sm:$0xff] %v2677
        %2684 = vst [vmem:[%s379 + $0x18] sm:$0xff] %v2679
        %s2685 = sand.u32 %s172, 1
        %s2686 = scalar_lea.sflag [#allocation9], %s2685
        %s2687 = sand.u32 %s172, 1
        %s2688 = smul.addr %s2687, 32
        %s2689 = scalar_lea.vmem [#allocation18], %s2688
        // Predicated region
        $region69: #{tpu_custom_call.1} parent=43 // pred_check
          %p2690 = pneg %p182
        $region70: #{tpu_custom_call.1} parent=43 // pred_check_branch
          %2692 = sbr.rel (%p2690) target = $region72
        $region71: #{tpu_custom_call.1} parent=43 // pred_region
          %2694 = vsyncadd %s2686, 0
          %s2695 = smul.addr %s28, 4
          %s2696 = smul.addr %s2695, 8
          %s2697 = scalar_lea.hbm %s6, %s2696
          %s2698 = sshll.u32 %s2689, 4
          %s2699 = int_to_ptr.vmem [resolvable:$true] %s2698
          %s2700 = sshll.u32 %s2697, 4
          %s2701 = int_to_ptr.hbm [resolvable:$true] %s2700
          %2706 = dma.vmem_to_hbm [thread:$0]  %s2699, 512, %s2701, %s2686, 128, 128, 8
        $region72: #{tpu_custom_call.1} parent=43 // pred_fallthru
          _
      $region44: #{tpu_custom_call.1} parent=5 // pred_fallthru
        _
      %p2707 = scmp.le.s32.totalorder 2, %s23
      // Predicated region
      $region73: #{tpu_custom_call.1} parent=5 // pred_check
        %p2708 = pneg %p2707
      $region74: #{tpu_custom_call.1} parent=5 // pred_check_branch
        %2710 = sbr.rel (%p2708) target = $region76
      $region75: #{tpu_custom_call.1} parent=5 // pred_region
        %s2711 = ssub.s32 %s23, 2
        // Predicated region
        $region77: #{tpu_custom_call.1} parent=75 // pred_check
          %p2712 = pneg %p188
        $region78: #{tpu_custom_call.1} parent=75 // pred_check_branch
          %2714 = sbr.rel (%p2712) target = $region80
        $region79: #{tpu_custom_call.1} parent=75 // pred_region
          %s2715 = sand.u32 %s173, 1
          %s2716 = scalar_lea.sflag [#allocation9], %s2715
          %s2717 = sand.u32 %s173, 1
          %s2718 = smul.addr %s2717, 32
          %s2719 = scalar_lea.vmem [#allocation18], %s2718
          %2721 = dma.done %s2716, 512
        $region80: #{tpu_custom_call.1} parent=75 // pred_fallthru
          _
      $region76: #{tpu_custom_call.1} parent=5 // pred_fallthru
        _
    $region6: #{tpu_custom_call.1} parent=1 // loop_footer
      %s27 = sadd.s32 1, %s23
    $region7: #{tpu_custom_call.1} parent=1 // loop_footer_branch
      %22 = sbr.rel target = $region3
    $region8: #{tpu_custom_call.1} parent=1 // loop_exit
      _
    %2722 = vsyncpa [#allocation8], 1
    %s2723 = scalar_lea.sflag [#allocation8], 1
    %2724 = vsyncpa %s2723, 1
    %2725 = vsyncpa [#allocation11], 1
    %s2726 = scalar_lea.sflag [#allocation11], 1
    %2727 = vsyncpa %s2726, 1
    %2728 = vsyncpa [#allocation14], 1
    %2729 = vsyncpa [#allocation17], 1
    %s2730 = scalar_lea.sflag [#allocation17], 1
    %2731 = vsyncpa %s2730, 1
    %2732 = vsyncpa [#allocation9], 1
    %s2733 = scalar_lea.sflag [#allocation9], 1
    %2734 = vsyncpa %s2733, 1

</llo_original>
